<compile_context>
chip_gen: v7x
topology: tpu7x:2x2x1
jax: 0.10.0
libtpu: 0.0.40
codegen_flags: <defaults>
</compile_context>

<pallas_src>
import functools

import jax
import jax.numpy as jnp
from jax.experimental import pallas as pl
from jax.experimental.pallas import tpu as pltpu


# --------------------------- helpers ------------------------------------------

def _tile(dim, target, quanta=(128,)):
    """Largest tile <= target that divides dim (multiple of a quantum).
    quanta are tried in order (e.g. (256, 128) prefers full MXU depth).
    If dim <= target the full dimension is used (always layout-legal)."""
    if dim <= target:
        return dim
    for q in quanta:
        t = (target // q) * q
        while t >= q:
            if dim % t == 0:
                return t
            t -= q
    return dim  # fallback: whole dim (may be large for awkward sizes)


def _cparams(sem, working_set_bytes):
    """CompilerParams with explicit scoped-VMEM limit (headroom, v7x-safe cap)."""
    limit = int(min(max(2 * working_set_bytes, 32 * 1024 * 1024),
                    56 * 1024 * 1024))
    return pltpu.CompilerParams(dimension_semantics=sem, vmem_limit_bytes=limit)


def _head_grouping(num_heads, head_dim):
    """Heads per attention group so the group width is 128-lane aligned."""
    H = num_heads * head_dim
    target = max(1, 128 // head_dim)
    hpg = 1
    for c in range(min(target, num_heads), 0, -1):
        if num_heads % c == 0:
            hpg = c
            break
    gw = hpg * head_dim
    if gw != H and gw % 128 != 0:
        hpg, gw = num_heads, H          # fall back to a single whole-H group
    return hpg, gw


def _bias_act_f32(acc, b, activation):
    h = acc + b
    if activation == "gelu":
        # BERT intermediate activation. Tanh approximation, math in f32.
        # TODO(synk): exact erf-based GELU if lax.erf gains a Mosaic lowering.
        c = jnp.float32(0.7978845608028654)  # sqrt(2/pi)
        h2 = h * h
        h = 0.5 * h * (1.0 + jnp.tanh(c * (h + jnp.float32(0.044715) * h2 * h)))
    return h


def _res_ln_f32(h, res, gamma, beta, eps):
    h = h + res
    mean = jnp.mean(h, axis=-1, keepdims=True)
    cen = h - mean
    var = jnp.mean(cen * cen, axis=-1, keepdims=True)
    return cen * jax.lax.rsqrt(var + eps) * gamma + beta


# --------------------------- tiled linear (+ optional GELU) ------------------

def _matmul_kernel_acc(x_ref, w_ref, b_ref, o_ref, acc_ref, *, activation):
    @pl.when(pl.program_id(2) == 0)
    def _():
        acc_ref[...] = jnp.zeros_like(acc_ref)

    acc_ref[...] += jnp.dot(x_ref[...], w_ref[...],
                            preferred_element_type=jnp.float32)

    @pl.when(pl.program_id(2) == pl.num_programs(2) - 1)
    def _():
        o_ref[...] = _bias_act_f32(acc_ref[...], b_ref[...],
                                   activation).astype(o_ref.dtype)


def _matmul_kernel_noacc(x_ref, w_ref, b_ref, o_ref, *, activation):
    h = jnp.dot(x_ref[...], w_ref[...], preferred_element_type=jnp.float32)
    o_ref[...] = _bias_act_f32(h, b_ref[...], activation).astype(o_ref.dtype)


def matmul(x, w, b, *, activation="none", out_dtype=jnp.bfloat16,
           tm=512, tn=1024, tk=1536):
    """Tiled x:(M,K) @ w:(K,N) + b with f32 accumulation; optional GELU epilogue.
    Whole-K contraction (no accumulator grid loop) whenever K <= tk."""
    M, K = x.shape
    N = w.shape[1]
    bm = _tile(M, tm, (16, 8))
    bn = _tile(N, tn, (128,))
    bk = _tile(K, tk, (256, 128))
    nk = K // bk
    b2 = b.reshape(1, N).astype(jnp.float32)
    out_isz = jnp.dtype(out_dtype).itemsize
    est = 2 * (bm * bk * x.dtype.itemsize + bk * bn * w.dtype.itemsize
               + bm * bn * out_isz + bn * 4)

    if nk == 1:
        kern = functools.partial(_matmul_kernel_noacc, activation=activation)
        return pl.pallas_call(
            kern,
            out_shape=jax.ShapeDtypeStruct((M, N), out_dtype),
            grid=(M // bm, N // bn),
            in_specs=[pl.BlockSpec((bm, K), lambda i, j: (i, 0)),
                      pl.BlockSpec((K, bn), lambda i, j: (0, j)),
                      pl.BlockSpec((1, bn), lambda i, j: (0, j))],
            out_specs=pl.BlockSpec((bm, bn), lambda i, j: (i, j)),
            compiler_params=_cparams(("parallel", "parallel"), est),
        )(x, w, b2)

    est += bm * bn * 4  # f32 accumulator scratch
    kern = functools.partial(_matmul_kernel_acc, activation=activation)
    return pl.pallas_call(
        kern,
        out_shape=jax.ShapeDtypeStruct((M, N), out_dtype),
        grid=(M // bm, N // bn, nk),
        in_specs=[pl.BlockSpec((bm, bk), lambda i, j, k: (i, k)),
                  pl.BlockSpec((bk, bn), lambda i, j, k: (k, j)),
                  pl.BlockSpec((1, bn), lambda i, j, k: (0, j))],
        out_specs=pl.BlockSpec((bm, bn), lambda i, j, k: (i, j)),
        scratch_shapes=[pltpu.VMEM((bm, bn), jnp.float32)],
        compiler_params=_cparams(("parallel", "parallel", "arbitrary"), est),
    )(x, w, b2)


# --------------------------- linear + residual + LayerNorm fusion ------------

def _linres_ln_kernel_acc(x_ref, w_ref, b_ref, res_ref, g_ref, bb_ref,
                          o_ref, acc_ref, *, eps):
    @pl.when(pl.program_id(1) == 0)
    def _():
        acc_ref[...] = jnp.zeros_like(acc_ref)

    acc_ref[...] += jnp.dot(x_ref[...], w_ref[...],
                            preferred_element_type=jnp.float32)

    @pl.when(pl.program_id(1) == pl.num_programs(1) - 1)
    def _():
        h = acc_ref[...] + b_ref[...]
        o_ref[...] = _res_ln_f32(h, res_ref[...].astype(jnp.float32),
                                 g_ref[...], bb_ref[...], eps).astype(o_ref.dtype)


def _linres_ln_kernel_noacc(x_ref, w_ref, b_ref, res_ref, g_ref, bb_ref,
                            o_ref, *, eps):
    h = jnp.dot(x_ref[...], w_ref[...],
                preferred_element_type=jnp.float32) + b_ref[...]
    o_ref[...] = _res_ln_f32(h, res_ref[...].astype(jnp.float32),
                             g_ref[...], bb_ref[...], eps).astype(o_ref.dtype)


def linear_residual_ln(x, w, b, res, gamma, beta, *, eps=1e-12, tm=512, tk=1536):
    """LayerNorm(x @ w + b + res). N (=hidden) stays whole so the LN row
    statistics live in the epilogue; K is whole when it fits (no acc loop)."""
    M, K = x.shape
    N = w.shape[1]
    bm = _tile(M, tm, (16, 8))
    bk = _tile(K, tk, (256, 128))
    nk = K // bk
    b2 = b.reshape(1, N).astype(jnp.float32)
    g2 = gamma.reshape(1, N).astype(jnp.float32)
    be2 = beta.reshape(1, N).astype(jnp.float32)
    est = 2 * (bm * bk * x.dtype.itemsize + bk * N * w.dtype.itemsize
               + bm * N * res.dtype.itemsize * 2 + 3 * N * 4)

    if nk == 1:
        kern = functools.partial(_linres_ln_kernel_noacc, eps=eps)
        return pl.pallas_call(
            kern,
            out_shape=jax.ShapeDtypeStruct((M, N), res.dtype),
            grid=(M // bm,),
            in_specs=[pl.BlockSpec((bm, K), lambda i: (i, 0)),
                      pl.BlockSpec((K, N), lambda i: (0, 0)),
                      pl.BlockSpec((1, N), lambda i: (0, 0)),
                      pl.BlockSpec((bm, N), lambda i: (i, 0)),
                      pl.BlockSpec((1, N), lambda i: (0, 0)),
                      pl.BlockSpec((1, N), lambda i: (0, 0))],
            out_specs=pl.BlockSpec((bm, N), lambda i: (i, 0)),
            compiler_params=_cparams(("parallel",), est),
        )(x, w, b2, res, g2, be2)

    est += bm * N * 4  # f32 accumulator scratch
    kern = functools.partial(_linres_ln_kernel_acc, eps=eps)
    return pl.pallas_call(
        kern,
        out_shape=jax.ShapeDtypeStruct((M, N), res.dtype),
        grid=(M // bm, nk),
        in_specs=[pl.BlockSpec((bm, bk), lambda i, k: (i, k)),
                  pl.BlockSpec((bk, N), lambda i, k: (k, 0)),
                  pl.BlockSpec((1, N), lambda i, k: (0, 0)),
                  pl.BlockSpec((bm, N), lambda i, k: (i, 0)),
                  pl.BlockSpec((1, N), lambda i, k: (0, 0)),
                  pl.BlockSpec((1, N), lambda i, k: (0, 0))],
        out_specs=pl.BlockSpec((bm, N), lambda i, k: (i, 0)),
        scratch_shapes=[pltpu.VMEM((bm, N), jnp.float32)],
        compiler_params=_cparams(("parallel", "arbitrary"), est),
    )(x, w, b2, res, g2, be2)


# --------------------------- LayerNorm-only (embeddings) ---------------------

def _layernorm_kernel(x_ref, g_ref, b_ref, o_ref, *, eps):
    h = x_ref[...].astype(jnp.float32)
    mean = jnp.mean(h, axis=-1, keepdims=True)
    cen = h - mean
    var = jnp.mean(cen * cen, axis=-1, keepdims=True)
    o_ref[...] = (cen * jax.lax.rsqrt(var + eps) * g_ref[...]
                  + b_ref[...]).astype(o_ref.dtype)


def layernorm(x, gamma, beta, *, eps=1e-12, out_dtype=None, tm=512):
    M, H = x.shape
    out_dtype = out_dtype or x.dtype
    bm = _tile(M, tm, (16, 8))
    est = 2 * (bm * H * x.dtype.itemsize
               + bm * H * jnp.dtype(out_dtype).itemsize + 2 * H * 4)
    kern = functools.partial(_layernorm_kernel, eps=eps)
    return pl.pallas_call(
        kern,
        out_shape=jax.ShapeDtypeStruct((M, H), out_dtype),
        grid=(M // bm,),
        in_specs=[pl.BlockSpec((bm, H), lambda i: (i, 0)),
                  pl.BlockSpec((1, H), lambda i: (0, 0)),
                  pl.BlockSpec((1, H), lambda i: (0, 0))],
        out_specs=pl.BlockSpec((bm, H), lambda i: (i, 0)),
        compiler_params=_cparams(("parallel",), est),
    )(x, gamma.reshape(1, H).astype(jnp.float32),
      beta.reshape(1, H).astype(jnp.float32))


# --------------------------- multi-head attention ----------------------------

def _attention_kernel(qkv_ref, bias_ref, o_ref, *, heads_per_group, head_dim):
    gw = heads_per_group * head_dim
    qkv = qkv_ref[0]                    # (S, 3*gw) bf16, layout [Q_grp | K_grp | V_grp]
    bias = bias_ref[0]                  # (1, S) f32 additive mask
    ctxs = []
    for h in range(heads_per_group):    # static unroll over the (small) group
        q = qkv[:, h * head_dim:(h + 1) * head_dim]          # scale pre-folded into W_q
        k = qkv[:, gw + h * head_dim:gw + (h + 1) * head_dim]
        v = qkv[:, 2 * gw + h * head_dim:2 * gw + (h + 1) * head_dim]
        # scores = q @ k^T without an explicit transpose (contract last dims)
        s = jax.lax.dot_general(q, k, (((1,), (1,)), ((), ())),
                                preferred_element_type=jnp.float32)
        s = s + bias                    # broadcast over query rows
        m = jnp.max(s, axis=-1, keepdims=True)
        p = jnp.exp(s - m)              # unnormalized probabilities
        denom = jnp.sum(p, axis=-1, keepdims=True)
        ctx = jnp.dot(p.astype(v.dtype), v, preferred_element_type=jnp.float32)
        # normalize the (S, Dh) context, not the (S, S) matrix (8x fewer VALU ops)
        ctxs.append(ctx * pl.reciprocal(denom, approx=True))
    out = ctxs[0] if len(ctxs) == 1 else jnp.concatenate(ctxs, axis=-1)
    o_ref[0] = out.astype(o_ref.dtype)  # one lane-dense (S, gw) store


def attention(qkv, bias, *, num_heads):
    """qkv: (B, S, 3H) fused, group-interleaved projections; bias: (B, 1, S).
    grid = (batch, head-groups), both parallel (megacore-friendly)."""
    B, S, threeH = qkv.shape
    H = threeH // 3
    Dh = H // num_heads
    hpg, gw = _head_grouping(num_heads, Dh)
    G = num_heads // hpg
    kern = functools.partial(_attention_kernel, heads_per_group=hpg, head_dim=Dh)
    est = (2 * (S * 3 * gw * qkv.dtype.itemsize + S * 4
                + S * gw * qkv.dtype.itemsize)
           + hpg * (2 * S * S * 4 + S * gw * 4))
    return pl.pallas_call(
        kern,
        out_shape=jax.ShapeDtypeStruct((B, S, H), qkv.dtype),
        grid=(B, G),
        in_specs=[pl.BlockSpec((1, S, 3 * gw), lambda b, g: (b, 0, g)),
                  pl.BlockSpec((1, 1, S), lambda b, g: (b, 0, 0))],
        out_specs=pl.BlockSpec((1, S, gw), lambda b, g: (b, 0, g)),
        compiler_params=_cparams(("parallel", "parallel"), est),
    )(qkv, bias)


# --------------------------- classifier head ---------------------------------

def _small_linear_kernel(x_ref, w_ref, b_ref, o_ref):
    o_ref[...] = (jnp.dot(x_ref[...], w_ref[...],
                          preferred_element_type=jnp.float32)
                  + b_ref[...]).astype(o_ref.dtype)


def classifier_head(x, w_pad, b_pad, num_labels):
    """(B, H) @ (H, Np) with Np pre-padded to 128 lanes (unmasked store);
    the real columns are sliced back out in JAX."""
    M, K = x.shape
    Np = w_pad.shape[1]
    out = pl.pallas_call(
        _small_linear_kernel,
        out_shape=jax.ShapeDtypeStruct((M, Np), jnp.float32),
        in_specs=[pl.BlockSpec((M, K), lambda: (0, 0)),
                  pl.BlockSpec((K, Np), lambda: (0, 0)),
                  pl.BlockSpec((1, Np), lambda: (0, 0))],
        out_specs=pl.BlockSpec((M, Np), lambda: (0, 0)),
        compiler_params=pltpu.CompilerParams(vmem_limit_bytes=32 * 1024 * 1024),
    )(x, w_pad, b_pad)
    return out[:, :num_labels]


# --------------------------- parameters --------------------------------------

def make_params(key, cfg):
    H, I = cfg["hidden"], cfg["intermediate"]
    nH = cfg["heads"]
    Dh = H // nH
    hpg, gw = _head_grouping(nH, Dh)
    G = H // gw
    scale = 1.0 / float(Dh) ** 0.5
    bf = jnp.bfloat16

    def norm(k, shape):
        return 0.02 * jax.random.normal(k, shape, jnp.float32)

    keys = iter(jax.random.split(key, 8 + 8 * cfg["layers"]))
    p = {
        "word_emb": norm(next(keys), (cfg["vocab"], H)),
        "pos_emb": norm(next(keys), (cfg["max_pos"], H)),
        "type_emb": norm(next(keys), (cfg["type_vocab"], H)),
        "emb_ln_g": jnp.ones((H,), jnp.float32),
        "emb_ln_b": jnp.zeros((H,), jnp.float32),
        "layers": [],
    }
    for _ in range(cfg["layers"]):
        # fold the 1/sqrt(head_dim) attention scale into W_q/b_q (zero runtime cost)
        wq = norm(next(keys), (H, H)) * scale
        wk = norm(next(keys), (H, H))
        wv = norm(next(keys), (H, H))
        bq = jnp.zeros((H,), jnp.float32) * scale
        bk_ = jnp.zeros((H,), jnp.float32)
        bv = jnp.zeros((H,), jnp.float32)
        # group-interleaved fused QKV layout: [Q_g0|K_g0|V_g0 | Q_g1|K_g1|V_g1 | ...]
        wg, bg = [], []
        for g in range(G):
            sl = slice(g * gw, (g + 1) * gw)
            wg += [wq[:, sl], wk[:, sl], wv[:, sl]]
            bg += [bq[sl], bk_[sl], bv[sl]]
        p["layers"].append(dict(
            w_qkv=jnp.concatenate(wg, axis=1).astype(bf),     # (H, 3H) interleaved
            b_qkv=jnp.concatenate(bg, axis=0),                # (3H,) f32
            wo=norm(next(keys), (H, H)).astype(bf), bo=jnp.zeros((H,), jnp.float32),
            attn_ln_g=jnp.ones((H,), jnp.float32),
            attn_ln_b=jnp.zeros((H,), jnp.float32),
            wi=norm(next(keys), (H, I)).astype(bf), bi=jnp.zeros((I,), jnp.float32),
            wo2=norm(next(keys), (I, H)).astype(bf), bo2=jnp.zeros((H,), jnp.float32),
            ffn_ln_g=jnp.ones((H,), jnp.float32),
            ffn_ln_b=jnp.zeros((H,), jnp.float32),
        ))
    # classifier, pre-padded to 128 lanes once (not on every forward)
    N = cfg["num_labels"]
    Np = max(128, ((N + 127) // 128) * 128)
    cls_w = norm(next(keys), (H, N))
    p["cls_w_pad"] = jnp.zeros((H, Np), bf).at[:, :N].set(cls_w.astype(bf))
    p["cls_b_pad"] = jnp.zeros((1, Np), jnp.float32)
    return p


# --------------------------- forward ------------------------------------------

def sa_linear_model_forward(params, input_ids, *, cfg):
    B, S = input_ids.shape
    H, nH = cfg["hidden"], cfg["heads"]

    # attention_mask = 1 where input_ids != 0 (same as the PyTorch module)
    attention_mask = (input_ids != 0).astype(jnp.float32)            # (B, S)
    ext_bias = ((1.0 - attention_mask) * -10000.0).reshape(B, 1, S)  # additive mask

    # Embeddings (gather stays in JAX); cast the sum to bf16 before the LN kernel
    # to halve the HBM round trip of this mem-bound stage (stats are f32 inside).
    pos_ids = jnp.arange(S)
    x = (params["word_emb"][input_ids]
         + params["pos_emb"][pos_ids][None, :, :]
         + params["type_emb"][0][None, None, :])                     # (B, S, H) f32
    x2d = layernorm(x.reshape(B * S, H).astype(jnp.bfloat16),
                    params["emb_ln_g"], params["emb_ln_b"],
                    out_dtype=jnp.bfloat16)

    for l in params["layers"]:
        # fused QKV projection: one (M,H)x(H,3H) whole-K tiled matmul
        qkv = matmul(x2d, l["w_qkv"], l["b_qkv"])                    # (B*S, 3H) bf16
        # lane-dense attention, grid=(B, head_groups), no transposes
        ctx = attention(qkv.reshape(B, S, 3 * H), ext_bias, num_heads=nH)
        ctx2d = ctx.reshape(B * S, H)
        # attention output projection fused with residual-add + LayerNorm
        x2d = linear_residual_ln(ctx2d, l["wo"], l["bo"], x2d,
                                 l["attn_ln_g"], l["attn_ln_b"])
        # FFN: intermediate matmul with GELU epilogue, then fused proj+res+LN
        inter = matmul(x2d, l["wi"], l["bi"], activation="gelu")
        x2d = linear_residual_ln(inter, l["wo2"], l["bo2"], x2d,
                                 l["ffn_ln_g"], l["ffn_ln_b"])

    seq_out = x2d.reshape(B, S, H)
    cls = seq_out[:, 0, :]                 # sequence_output[:, 0, :]
    # dropout is identity in eval mode
    logits = classifier_head(cls, params["cls_w_pad"], params["cls_b_pad"],
                             cfg["num_labels"])
    return logits


# --------------------------- driver -------------------------------------------

if __name__ == "__main__":
    cfg = dict(vocab=100, hidden=32, layers=2, heads=4, intermediate=64,
               max_pos=64, type_vocab=2, num_labels=2)
    key = jax.random.PRNGKey(0)
    pkey, dkey = jax.random.split(key)
    params = make_params(pkey, cfg)

    B, S = 2, 8
    input_ids = jax.random.randint(dkey, (B, S), 1, cfg["vocab"], dtype=jnp.int32)
    input_ids = input_ids.at[:, -2:].set(0)   # padding tokens exercise the mask path

    fwd = jax.jit(functools.partial(sa_linear_model_forward, cfg=cfg))
    logits = fwd(params, input_ids)
    jax.block_until_ready(logits)
    assert logits.shape == (B, cfg["num_labels"])
    assert logits.dtype == jnp.float32
    print("KERNEL_OK")
</pallas_src>

<mosaic_0001>
module attributes {stable_mosaic.version = 11 : i64} {
  func.func @_layernorm_kernel(%arg0: i32, %arg1: memref<16x32xbf16, #tpu.memory_space<vmem>>, %arg2: memref<1x32xf32, #tpu.memory_space<vmem>>, %arg3: memref<1x32xf32, #tpu.memory_space<vmem>>, %arg4: memref<16x32xbf16, #tpu.memory_space<vmem>>) attributes {dimension_semantics = [#tpu.dimension_semantics<parallel>], iteration_bounds = array<i64: 1>, scalar_prefetch = 0 : i64, scratch_operands = 0 : i64, tpu.core_type = #tpu.core_type<tc>, window_params = [{transform_indices = @transform_0, window_bounds = array<i64: 16, 32>}, {pipeline_mode = #tpu.pipeline_mode<synchronous>, transform_indices = @transform_1, window_bounds = array<i64: 1, 32>}, {pipeline_mode = #tpu.pipeline_mode<synchronous>, transform_indices = @transform_2, window_bounds = array<i64: 1, 32>}, {transform_indices = @transform_3, window_bounds = array<i64: 16, 32>}]} {
    %c0 = arith.constant 0 : index
    %c0_0 = arith.constant 0 : index
    %0 = vector.load %arg1[%c0, %c0_0] : memref<16x32xbf16, #tpu.memory_space<vmem>>, vector<16x32xbf16>
    %1 = arith.extf %0 : vector<16x32xbf16> to vector<16x32xf32>
    %cst = arith.constant dense<0.000000e+00> : vector<16xf32>
    %2 = vector.multi_reduction <add>, %1, %cst [1] : vector<16x32xf32> to vector<16xf32>
    %3 = vector.shape_cast %2 : vector<16xf32> to vector<16x1xf32>
    %cst_1 = arith.constant 3.200000e+01 : f32
    %4 = vector.broadcast %cst_1 : f32 to vector<16x1xf32>
    %5 = arith.divf %3, %4 : vector<16x1xf32>
    %6 = vector.broadcast %5 : vector<16x1xf32> to vector<16x32xf32>
    %7 = arith.subf %1, %6 : vector<16x32xf32>
    %8 = arith.mulf %7, %7 : vector<16x32xf32>
    %cst_2 = arith.constant dense<0.000000e+00> : vector<16xf32>
    %9 = vector.multi_reduction <add>, %8, %cst_2 [1] : vector<16x32xf32> to vector<16xf32>
    %10 = vector.shape_cast %9 : vector<16xf32> to vector<16x1xf32>
    %cst_3 = arith.constant 3.200000e+01 : f32
    %11 = vector.broadcast %cst_3 : f32 to vector<16x1xf32>
    %12 = arith.divf %10, %11 : vector<16x1xf32>
    %cst_4 = arith.constant 9.99999996E-13 : f32
    %13 = vector.broadcast %cst_4 : f32 to vector<16x1xf32>
    %14 = arith.addf %12, %13 : vector<16x1xf32>
    %15 = math.rsqrt %14 : vector<16x1xf32>
    %16 = vector.broadcast %15 : vector<16x1xf32> to vector<16x32xf32>
    %17 = arith.mulf %7, %16 : vector<16x32xf32>
    %c0_5 = arith.constant 0 : index
    %c0_6 = arith.constant 0 : index
    %18 = vector.load %arg2[%c0_5, %c0_6] : memref<1x32xf32, #tpu.memory_space<vmem>>, vector<1x32xf32>
    %19 = vector.broadcast %18 : vector<1x32xf32> to vector<16x32xf32>
    %20 = arith.mulf %17, %19 : vector<16x32xf32>
    %c0_7 = arith.constant 0 : index
    %c0_8 = arith.constant 0 : index
    %21 = vector.load %arg3[%c0_7, %c0_8] : memref<1x32xf32, #tpu.memory_space<vmem>>, vector<1x32xf32>
    %22 = vector.broadcast %21 : vector<1x32xf32> to vector<16x32xf32>
    %23 = arith.addf %20, %22 : vector<16x32xf32>
    %24 = arith.truncf %23 : vector<16x32xf32> to vector<16x32xbf16>
    %c0_9 = arith.constant 0 : index
    %c0_10 = arith.constant 0 : index
    %25 = vector.load %arg4[%c0_9, %c0_10] : memref<16x32xbf16, #tpu.memory_space<vmem>>, vector<16x32xbf16>
    tpu.vector_store %arg4[%c0_9, %c0_10], %24 {strides = array<i32>} : memref<16x32xbf16, #tpu.memory_space<vmem>>, vector<16x32xbf16>,
    return
  }
  func.func @transform_0(%arg0: i32) -> (i32, i32) {
    %c0_i32 = arith.constant 0 : i32
    %c0_i32_0 = arith.constant 0 : i32
    return %arg0, %c0_i32 : i32, i32
  }
  func.func @transform_1(%arg0: i32) -> (i32, i32) {
    %c0_i32 = arith.constant 0 : i32
    %c0_i32_0 = arith.constant 0 : i32
    %c0_i32_1 = arith.constant 0 : i32
    return %c0_i32, %c0_i32_0 : i32, i32
  }
  func.func @transform_2(%arg0: i32) -> (i32, i32) {
    %c0_i32 = arith.constant 0 : i32
    %c0_i32_0 = arith.constant 0 : i32
    %c0_i32_1 = arith.constant 0 : i32
    return %c0_i32, %c0_i32_0 : i32, i32
  }
  func.func @transform_3(%arg0: i32) -> (i32, i32) {
    %c0_i32 = arith.constant 0 : i32
    %c0_i32_0 = arith.constant 0 : i32
    return %arg0, %c0_i32 : i32, i32
  }
}

module attributes {stable_mosaic.version = 11 : i64} {
  func.func @_matmul_kernel_noacc(%arg0: i32, %arg1: i32, %arg2: memref<16x32xbf16, #tpu.memory_space<vmem>>, %arg3: memref<32x96xbf16, #tpu.memory_space<vmem>>, %arg4: memref<1x96xf32, #tpu.memory_space<vmem>>, %arg5: memref<16x96xbf16, #tpu.memory_space<vmem>>) attributes {dimension_semantics = [#tpu.dimension_semantics<parallel>, #tpu.dimension_semantics<parallel>], iteration_bounds = array<i64: 1, 1>, scalar_prefetch = 0 : i64, scratch_operands = 0 : i64, tpu.core_type = #tpu.core_type<tc>, window_params = [{transform_indices = @transform_0, window_bounds = array<i64: 16, 32>}, {transform_indices = @transform_1, window_bounds = array<i64: 32, 96>}, {transform_indices = @transform_2, window_bounds = array<i64: 1, 96>}, {transform_indices = @transform_3, window_bounds = array<i64: 16, 96>}]} {
    %c0 = arith.constant 0 : index
    %c0_0 = arith.constant 0 : index
    %0 = vector.load %arg2[%c0, %c0_0] : memref<16x32xbf16, #tpu.memory_space<vmem>>, vector<16x32xbf16>
    %c0_1 = arith.constant 0 : index
    %c0_2 = arith.constant 0 : index
    %1 = vector.load %arg3[%c0_1, %c0_2] : memref<32x96xbf16, #tpu.memory_space<vmem>>, vector<32x96xbf16>
    %cst = arith.constant dense<0.000000e+00> : vector<16x96xf32>
    %2 = tpu.matmul %0, %1, %cst {dimension_numbers = #tpu.dot_dimension_numbers<[1], [0], [0], [1], [0, 0, 1, 1], [], []>} : vector<16x32xbf16>, vector<32x96xbf16>, vector<16x96xf32> -> vector<16x96xf32>
    %c0_3 = arith.constant 0 : index
    %c0_4 = arith.constant 0 : index
    %3 = vector.load %arg4[%c0_3, %c0_4] : memref<1x96xf32, #tpu.memory_space<vmem>>, vector<1x96xf32>
    %4 = vector.broadcast %3 : vector<1x96xf32> to vector<16x96xf32>
    %5 = arith.addf %2, %4 : vector<16x96xf32>
    %6 = arith.truncf %5 : vector<16x96xf32> to vector<16x96xbf16>
    %c0_5 = arith.constant 0 : index
    %c0_6 = arith.constant 0 : index
    %7 = vector.load %arg5[%c0_5, %c0_6] : memref<16x96xbf16, #tpu.memory_space<vmem>>, vector<16x96xbf16>
    tpu.vector_store %arg5[%c0_5, %c0_6], %6 {strides = array<i32>} : memref<16x96xbf16, #tpu.memory_space<vmem>>, vector<16x96xbf16>,
    return
  }
  func.func @transform_0(%arg0: i32, %arg1: i32) -> (i32, i32) {
    %c0_i32 = arith.constant 0 : i32
    %c0_i32_0 = arith.constant 0 : i32
    return %arg0, %c0_i32 : i32, i32
  }
  func.func @transform_1(%arg0: i32, %arg1: i32) -> (i32, i32) {
    %c0_i32 = arith.constant 0 : i32
    %c0_i32_0 = arith.constant 0 : i32
    return %c0_i32, %arg1 : i32, i32
  }
  func.func @transform_2(%arg0: i32, %arg1: i32) -> (i32, i32) {
    %c0_i32 = arith.constant 0 : i32
    %c0_i32_0 = arith.constant 0 : i32
    return %c0_i32, %arg1 : i32, i32
  }
  func.func @transform_3(%arg0: i32, %arg1: i32) -> (i32, i32) {
    %c0_i32 = arith.constant 0 : i32
    return %arg0, %arg1 : i32, i32
  }
}

module attributes {stable_mosaic.version = 11 : i64} {
  func.func @_attention_kernel(%arg0: i32, %arg1: i32, %arg2: memref<1x8x96xbf16, #tpu.memory_space<vmem>>, %arg3: memref<1x1x8xf32, #tpu.memory_space<vmem>>, %arg4: memref<1x8x32xbf16, #tpu.memory_space<vmem>>) attributes {dimension_semantics = [#tpu.dimension_semantics<parallel>, #tpu.dimension_semantics<parallel>], iteration_bounds = array<i64: 2, 1>, scalar_prefetch = 0 : i64, scratch_operands = 0 : i64, tpu.core_type = #tpu.core_type<tc>, window_params = [{transform_indices = @transform_0, window_bounds = array<i64: 1, 8, 96>}, {transform_indices = @transform_1, window_bounds = array<i64: 1, 1, 8>}, {transform_indices = @transform_2, window_bounds = array<i64: 1, 8, 32>}]} {
    %c0 = arith.constant 0 : index
    %c0_0 = arith.constant 0 : index
    %c0_1 = arith.constant 0 : index
    %0 = vector.load %arg2[%c0, %c0_0, %c0_1] : memref<1x8x96xbf16, #tpu.memory_space<vmem>>, vector<1x8x96xbf16>
    %1 = vector.shape_cast %0 : vector<1x8x96xbf16> to vector<8x96xbf16>
    %c0_2 = arith.constant 0 : index
    %c0_3 = arith.constant 0 : index
    %c0_4 = arith.constant 0 : index
    %2 = vector.load %arg3[%c0_2, %c0_3, %c0_4] : memref<1x1x8xf32, #tpu.memory_space<vmem>>, vector<1x1x8xf32>
    %3 = vector.shape_cast %2 : vector<1x1x8xf32> to vector<1x8xf32>
    %4 = vector.extract_strided_slice %1 {offsets = [0, 0], sizes = [8, 8], strides = [1, 1]} : vector<8x96xbf16> to vector<8x8xbf16>
    %5 = vector.extract_strided_slice %1 {offsets = [0, 32], sizes = [8, 8], strides = [1, 1]} : vector<8x96xbf16> to vector<8x8xbf16>
    %6 = vector.extract_strided_slice %1 {offsets = [0, 64], sizes = [8, 8], strides = [1, 1]} : vector<8x96xbf16> to vector<8x8xbf16>
    %cst = arith.constant dense<0.000000e+00> : vector<8x8xf32>
    %7 = tpu.matmul %4, %5, %cst {dimension_numbers = #tpu.dot_dimension_numbers<[1], [1], [0], [0], [0, 0, 1, 0], [], []>} : vector<8x8xbf16>, vector<8x8xbf16>, vector<8x8xf32> -> vector<8x8xf32>
    %8 = vector.broadcast %3 : vector<1x8xf32> to vector<8x8xf32>
    %9 = arith.addf %7, %8 : vector<8x8xf32>
    %cst_5 = arith.constant dense<0xFF800000> : vector<8xf32>
    %10 = vector.multi_reduction <maximumf>, %9, %cst_5 [1] : vector<8x8xf32> to vector<8xf32>
    %11 = vector.shape_cast %10 : vector<8xf32> to vector<8x1xf32>
    %12 = vector.broadcast %11 : vector<8x1xf32> to vector<8x8xf32>
    %13 = arith.subf %9, %12 : vector<8x8xf32>
    %14 = math.exp %13 : vector<8x8xf32>
    %cst_6 = arith.constant dense<0.000000e+00> : vector<8xf32>
    %15 = vector.multi_reduction <add>, %14, %cst_6 [1] : vector<8x8xf32> to vector<8xf32>
    %16 = vector.shape_cast %15 : vector<8xf32> to vector<8x1xf32>
    %17 = arith.truncf %14 : vector<8x8xf32> to vector<8x8xbf16>
    %cst_7 = arith.constant dense<0.000000e+00> : vector<8x8xf32>
    %18 = tpu.matmul %17, %6, %cst_7 {dimension_numbers = #tpu.dot_dimension_numbers<[1], [0], [0], [1], [0, 0, 1, 1], [], []>} : vector<8x8xbf16>, vector<8x8xbf16>, vector<8x8xf32> -> vector<8x8xf32>
    %19 = tpu.reciprocal %16 {approx = true} : vector<8x1xf32> -> vector<8x1xf32>
    %20 = vector.broadcast %19 : vector<8x1xf32> to vector<8x8xf32>
    %21 = arith.mulf %18, %20 : vector<8x8xf32>
    %22 = vector.extract_strided_slice %1 {offsets = [0, 8], sizes = [8, 8], strides = [1, 1]} : vector<8x96xbf16> to vector<8x8xbf16>
    %23 = vector.extract_strided_slice %1 {offsets = [0, 40], sizes = [8, 8], strides = [1, 1]} : vector<8x96xbf16> to vector<8x8xbf16>
    %24 = vector.extract_strided_slice %1 {offsets = [0, 72], sizes = [8, 8], strides = [1, 1]} : vector<8x96xbf16> to vector<8x8xbf16>
    %cst_8 = arith.constant dense<0.000000e+00> : vector<8x8xf32>
    %25 = tpu.matmul %22, %23, %cst_8 {dimension_numbers = #tpu.dot_dimension_numbers<[1], [1], [0], [0], [0, 0, 1, 0], [], []>} : vector<8x8xbf16>, vector<8x8xbf16>, vector<8x8xf32> -> vector<8x8xf32>
    %26 = vector.broadcast %3 : vector<1x8xf32> to vector<8x8xf32>
    %27 = arith.addf %25, %26 : vector<8x8xf32>
    %cst_9 = arith.constant dense<0xFF800000> : vector<8xf32>
    %28 = vector.multi_reduction <maximumf>, %27, %cst_9 [1] : vector<8x8xf32> to vector<8xf32>
    %29 = vector.shape_cast %28 : vector<8xf32> to vector<8x1xf32>
    %30 = vector.broadcast %29 : vector<8x1xf32> to vector<8x8xf32>
    %31 = arith.subf %27, %30 : vector<8x8xf32>
    %32 = math.exp %31 : vector<8x8xf32>
    %cst_10 = arith.constant dense<0.000000e+00> : vector<8xf32>
    %33 = vector.multi_reduction <add>, %32, %cst_10 [1] : vector<8x8xf32> to vector<8xf32>
    %34 = vector.shape_cast %33 : vector<8xf32> to vector<8x1xf32>
    %35 = arith.truncf %32 : vector<8x8xf32> to vector<8x8xbf16>
    %cst_11 = arith.constant dense<0.000000e+00> : vector<8x8xf32>
    %36 = tpu.matmul %35, %24, %cst_11 {dimension_numbers = #tpu.dot_dimension_numbers<[1], [0], [0], [1], [0, 0, 1, 1], [], []>} : vector<8x8xbf16>, vector<8x8xbf16>, vector<8x8xf32> -> vector<8x8xf32>
    %37 = tpu.reciprocal %34 {approx = true} : vector<8x1xf32> -> vector<8x1xf32>
    %38 = vector.broadcast %37 : vector<8x1xf32> to vector<8x8xf32>
    %39 = arith.mulf %36, %38 : vector<8x8xf32>
    %40 = vector.extract_strided_slice %1 {offsets = [0, 16], sizes = [8, 8], strides = [1, 1]} : vector<8x96xbf16> to vector<8x8xbf16>
    %41 = vector.extract_strided_slice %1 {offsets = [0, 48], sizes = [8, 8], strides = [1, 1]} : vector<8x96xbf16> to vector<8x8xbf16>
    %42 = vector.extract_strided_slice %1 {offsets = [0, 80], sizes = [8, 8], strides = [1, 1]} : vector<8x96xbf16> to vector<8x8xbf16>
    %cst_12 = arith.constant dense<0.000000e+00> : vector<8x8xf32>
    %43 = tpu.matmul %40, %41, %cst_12 {dimension_numbers = #tpu.dot_dimension_numbers<[1], [1], [0], [0], [0, 0, 1, 0], [], []>} : vector<8x8xbf16>, vector<8x8xbf16>, vector<8x8xf32> -> vector<8x8xf32>
    %44 = vector.broadcast %3 : vector<1x8xf32> to vector<8x8xf32>
    %45 = arith.addf %43, %44 : vector<8x8xf32>
    %cst_13 = arith.constant dense<0xFF800000> : vector<8xf32>
    %46 = vector.multi_reduction <maximumf>, %45, %cst_13 [1] : vector<8x8xf32> to vector<8xf32>
    %47 = vector.shape_cast %46 : vector<8xf32> to vector<8x1xf32>
    %48 = vector.broadcast %47 : vector<8x1xf32> to vector<8x8xf32>
    %49 = arith.subf %45, %48 : vector<8x8xf32>
    %50 = math.exp %49 : vector<8x8xf32>
    %cst_14 = arith.constant dense<0.000000e+00> : vector<8xf32>
    %51 = vector.multi_reduction <add>, %50, %cst_14 [1] : vector<8x8xf32> to vector<8xf32>
    %52 = vector.shape_cast %51 : vector<8xf32> to vector<8x1xf32>
    %53 = arith.truncf %50 : vector<8x8xf32> to vector<8x8xbf16>
    %cst_15 = arith.constant dense<0.000000e+00> : vector<8x8xf32>
    %54 = tpu.matmul %53, %42, %cst_15 {dimension_numbers = #tpu.dot_dimension_numbers<[1], [0], [0], [1], [0, 0, 1, 1], [], []>} : vector<8x8xbf16>, vector<8x8xbf16>, vector<8x8xf32> -> vector<8x8xf32>
    %55 = tpu.reciprocal %52 {approx = true} : vector<8x1xf32> -> vector<8x1xf32>
    %56 = vector.broadcast %55 : vector<8x1xf32> to vector<8x8xf32>
    %57 = arith.mulf %54, %56 : vector<8x8xf32>
    %58 = vector.extract_strided_slice %1 {offsets = [0, 24], sizes = [8, 8], strides = [1, 1]} : vector<8x96xbf16> to vector<8x8xbf16>
    %59 = vector.extract_strided_slice %1 {offsets = [0, 56], sizes = [8, 8], strides = [1, 1]} : vector<8x96xbf16> to vector<8x8xbf16>
    %60 = vector.extract_strided_slice %1 {offsets = [0, 88], sizes = [8, 8], strides = [1, 1]} : vector<8x96xbf16> to vector<8x8xbf16>
    %cst_16 = arith.constant dense<0.000000e+00> : vector<8x8xf32>
    %61 = tpu.matmul %58, %59, %cst_16 {dimension_numbers = #tpu.dot_dimension_numbers<[1], [1], [0], [0], [0, 0, 1, 0], [], []>} : vector<8x8xbf16>, vector<8x8xbf16>, vector<8x8xf32> -> vector<8x8xf32>
    %62 = vector.broadcast %3 : vector<1x8xf32> to vector<8x8xf32>
    %63 = arith.addf %61, %62 : vector<8x8xf32>
    %cst_17 = arith.constant dense<0xFF800000> : vector<8xf32>
    %64 = vector.multi_reduction <maximumf>, %63, %cst_17 [1] : vector<8x8xf32> to vector<8xf32>
    %65 = vector.shape_cast %64 : vector<8xf32> to vector<8x1xf32>
    %66 = vector.broadcast %65 : vector<8x1xf32> to vector<8x8xf32>
    %67 = arith.subf %63, %66 : vector<8x8xf32>
    %68 = math.exp %67 : vector<8x8xf32>
    %cst_18 = arith.constant dense<0.000000e+00> : vector<8xf32>
    %69 = vector.multi_reduction <add>, %68, %cst_18 [1] : vector<8x8xf32> to vector<8xf32>
    %70 = vector.shape_cast %69 : vector<8xf32> to vector<8x1xf32>
    %71 = arith.truncf %68 : vector<8x8xf32> to vector<8x8xbf16>
    %cst_19 = arith.constant dense<0.000000e+00> : vector<8x8xf32>
    %72 = tpu.matmul %71, %60, %cst_19 {dimension_numbers = #tpu.dot_dimension_numbers<[1], [0], [0], [1], [0, 0, 1, 1], [], []>} : vector<8x8xbf16>, vector<8x8xbf16>, vector<8x8xf32> -> vector<8x8xf32>
    %73 = tpu.reciprocal %70 {approx = true} : vector<8x1xf32> -> vector<8x1xf32>
    %74 = vector.broadcast %73 : vector<8x1xf32> to vector<8x8xf32>
    %75 = arith.mulf %72, %74 : vector<8x8xf32>
    %76 = tpu.concatenate %21, %39, %57, %75 in 1 : vector<8x8xf32>, vector<8x8xf32>, vector<8x8xf32>, vector<8x8xf32> -> vector<8x32xf32>
    %77 = arith.truncf %76 : vector<8x32xf32> to vector<8x32xbf16>
    %c0_20 = arith.constant 0 : index
    %c0_21 = arith.constant 0 : index
    %c0_22 = arith.constant 0 : index
    %78 = vector.load %arg4[%c0_20, %c0_21, %c0_22] : memref<1x8x32xbf16, #tpu.memory_space<vmem>>, vector<1x8x32xbf16>
    %79 = vector.shape_cast %78 : vector<1x8x32xbf16> to vector<8x32xbf16>
    %80 = vector.shape_cast %77 : vector<8x32xbf16> to vector<1x8x32xbf16>
    tpu.vector_store %arg4[%c0_20, %c0_21, %c0_22], %80 {strides = array<i32>} : memref<1x8x32xbf16, #tpu.memory_space<vmem>>, vector<1x8x32xbf16>,
    return
  }
  func.func @transform_0(%arg0: i32, %arg1: i32) -> (i32, i32, i32) {
    %c0_i32 = arith.constant 0 : i32
    %c0_i32_0 = arith.constant 0 : i32
    return %arg0, %c0_i32, %arg1 : i32, i32, i32
  }
  func.func @transform_1(%arg0: i32, %arg1: i32) -> (i32, i32, i32) {
    %c0_i32 = arith.constant 0 : i32
    %c0_i32_0 = arith.constant 0 : i32
    %c0_i32_1 = arith.constant 0 : i32
    return %arg0, %c0_i32, %c0_i32_0 : i32, i32, i32
  }
  func.func @transform_2(%arg0: i32, %arg1: i32) -> (i32, i32, i32) {
    %c0_i32 = arith.constant 0 : i32
    %c0_i32_0 = arith.constant 0 : i32
    return %arg0, %c0_i32, %arg1 : i32, i32, i32
  }
}

module attributes {stable_mosaic.version = 11 : i64} {
  func.func @_linres_ln_kernel_noacc(%arg0: i32, %arg1: memref<16x32xbf16, #tpu.memory_space<vmem>>, %arg2: memref<32x32xbf16, #tpu.memory_space<vmem>>, %arg3: memref<1x32xf32, #tpu.memory_space<vmem>>, %arg4: memref<16x32xbf16, #tpu.memory_space<vmem>>, %arg5: memref<1x32xf32, #tpu.memory_space<vmem>>, %arg6: memref<1x32xf32, #tpu.memory_space<vmem>>, %arg7: memref<16x32xbf16, #tpu.memory_space<vmem>>) attributes {dimension_semantics = [#tpu.dimension_semantics<parallel>], iteration_bounds = array<i64: 1>, scalar_prefetch = 0 : i64, scratch_operands = 0 : i64, tpu.core_type = #tpu.core_type<tc>, window_params = [{transform_indices = @transform_0, window_bounds = array<i64: 16, 32>}, {pipeline_mode = #tpu.pipeline_mode<synchronous>, transform_indices = @transform_1, window_bounds = array<i64: 32, 32>}, {pipeline_mode = #tpu.pipeline_mode<synchronous>, transform_indices = @transform_2, window_bounds = array<i64: 1, 32>}, {transform_indices = @transform_3, window_bounds = array<i64: 16, 32>}, {pipeline_mode = #tpu.pipeline_mode<synchronous>, transform_indices = @transform_4, window_bounds = array<i64: 1, 32>}, {pipeline_mode = #tpu.pipeline_mode<synchronous>, transform_indices = @transform_5, window_bounds = array<i64: 1, 32>}, {transform_indices = @transform_6, window_bounds = array<i64: 16, 32>}]} {
    %c0 = arith.constant 0 : index
    %c0_0 = arith.constant 0 : index
    %0 = vector.load %arg1[%c0, %c0_0] : memref<16x32xbf16, #tpu.memory_space<vmem>>, vector<16x32xbf16>
    %c0_1 = arith.constant 0 : index
    %c0_2 = arith.constant 0 : index
    %1 = vector.load %arg2[%c0_1, %c0_2] : memref<32x32xbf16, #tpu.memory_space<vmem>>, vector<32x32xbf16>
    %cst = arith.constant dense<0.000000e+00> : vector<16x32xf32>
    %2 = tpu.matmul %0, %1, %cst {dimension_numbers = #tpu.dot_dimension_numbers<[1], [0], [0], [1], [0, 0, 1, 1], [], []>} : vector<16x32xbf16>, vector<32x32xbf16>, vector<16x32xf32> -> vector<16x32xf32>
    %c0_3 = arith.constant 0 : index
    %c0_4 = arith.constant 0 : index
    %3 = vector.load %arg3[%c0_3, %c0_4] : memref<1x32xf32, #tpu.memory_space<vmem>>, vector<1x32xf32>
    %4 = vector.broadcast %3 : vector<1x32xf32> to vector<16x32xf32>
    %5 = arith.addf %2, %4 : vector<16x32xf32>
    %c0_5 = arith.constant 0 : index
    %c0_6 = arith.constant 0 : index
    %6 = vector.load %arg4[%c0_5, %c0_6] : memref<16x32xbf16, #tpu.memory_space<vmem>>, vector<16x32xbf16>
    %7 = arith.extf %6 : vector<16x32xbf16> to vector<16x32xf32>
    %c0_7 = arith.constant 0 : index
    %c0_8 = arith.constant 0 : index
    %8 = vector.load %arg5[%c0_7, %c0_8] : memref<1x32xf32, #tpu.memory_space<vmem>>, vector<1x32xf32>
    %c0_9 = arith.constant 0 : index
    %c0_10 = arith.constant 0 : index
    %9 = vector.load %arg6[%c0_9, %c0_10] : memref<1x32xf32, #tpu.memory_space<vmem>>, vector<1x32xf32>
    %10 = arith.addf %5, %7 : vector<16x32xf32>
    %cst_11 = arith.constant dense<0.000000e+00> : vector<16xf32>
    %11 = vector.multi_reduction <add>, %10, %cst_11 [1] : vector<16x32xf32> to vector<16xf32>
    %12 = vector.shape_cast %11 : vector<16xf32> to vector<16x1xf32>
    %cst_12 = arith.constant 3.200000e+01 : f32
    %13 = vector.broadcast %cst_12 : f32 to vector<16x1xf32>
    %14 = arith.divf %12, %13 : vector<16x1xf32>
    %15 = vector.broadcast %14 : vector<16x1xf32> to vector<16x32xf32>
    %16 = arith.subf %10, %15 : vector<16x32xf32>
    %17 = arith.mulf %16, %16 : vector<16x32xf32>
    %cst_13 = arith.constant dense<0.000000e+00> : vector<16xf32>
    %18 = vector.multi_reduction <add>, %17, %cst_13 [1] : vector<16x32xf32> to vector<16xf32>
    %19 = vector.shape_cast %18 : vector<16xf32> to vector<16x1xf32>
    %cst_14 = arith.constant 3.200000e+01 : f32
    %20 = vector.broadcast %cst_14 : f32 to vector<16x1xf32>
    %21 = arith.divf %19, %20 : vector<16x1xf32>
    %cst_15 = arith.constant 9.99999996E-13 : f32
    %22 = vector.broadcast %cst_15 : f32 to vector<16x1xf32>
    %23 = arith.addf %21, %22 : vector<16x1xf32>
    %24 = math.rsqrt %23 : vector<16x1xf32>
    %25 = vector.broadcast %24 : vector<16x1xf32> to vector<16x32xf32>
    %26 = arith.mulf %16, %25 : vector<16x32xf32>
    %27 = vector.broadcast %8 : vector<1x32xf32> to vector<16x32xf32>
    %28 = arith.mulf %26, %27 : vector<16x32xf32>
    %29 = vector.broadcast %9 : vector<1x32xf32> to vector<16x32xf32>
    %30 = arith.addf %28, %29 : vector<16x32xf32>
    %31 = arith.truncf %30 : vector<16x32xf32> to vector<16x32xbf16>
    %c0_16 = arith.constant 0 : index
    %c0_17 = arith.constant 0 : index
    %32 = vector.load %arg7[%c0_16, %c0_17] : memref<16x32xbf16, #tpu.memory_space<vmem>>, vector<16x32xbf16>
    tpu.vector_store %arg7[%c0_16, %c0_17], %31 {strides = array<i32>} : memref<16x32xbf16, #tpu.memory_space<vmem>>, vector<16x32xbf16>,
    return
  }
  func.func @transform_0(%arg0: i32) -> (i32, i32) {
    %c0_i32 = arith.constant 0 : i32
    %c0_i32_0 = arith.constant 0 : i32
    return %arg0, %c0_i32 : i32, i32
  }
  func.func @transform_1(%arg0: i32) -> (i32, i32) {
    %c0_i32 = arith.constant 0 : i32
    %c0_i32_0 = arith.constant 0 : i32
    %c0_i32_1 = arith.constant 0 : i32
    return %c0_i32, %c0_i32_0 : i32, i32
  }
  func.func @transform_2(%arg0: i32) -> (i32, i32) {
    %c0_i32 = arith.constant 0 : i32
    %c0_i32_0 = arith.constant 0 : i32
    %c0_i32_1 = arith.constant 0 : i32
    return %c0_i32, %c0_i32_0 : i32, i32
  }
  func.func @transform_3(%arg0: i32) -> (i32, i32) {
    %c0_i32 = arith.constant 0 : i32
    %c0_i32_0 = arith.constant 0 : i32
    return %arg0, %c0_i32 : i32, i32
  }
  func.func @transform_4(%arg0: i32) -> (i32, i32) {
    %c0_i32 = arith.constant 0 : i32
    %c0_i32_0 = arith.constant 0 : i32
    %c0_i32_1 = arith.constant 0 : i32
    return %c0_i32, %c0_i32_0 : i32, i32
  }
  func.func @transform_5(%arg0: i32) -> (i32, i32) {
    %c0_i32 = arith.constant 0 : i32
    %c0_i32_0 = arith.constant 0 : i32
    %c0_i32_1 = arith.constant 0 : i32
    return %c0_i32, %c0_i32_0 : i32, i32
  }
  func.func @transform_6(%arg0: i32) -> (i32, i32) {
    %c0_i32 = arith.constant 0 : i32
    %c0_i32_0 = arith.constant 0 : i32
    return %arg0, %c0_i32 : i32, i32
  }
}

module attributes {stable_mosaic.version = 11 : i64} {
  func.func @_matmul_kernel_noacc(%arg0: i32, %arg1: i32, %arg2: memref<16x32xbf16, #tpu.memory_space<vmem>>, %arg3: memref<32x64xbf16, #tpu.memory_space<vmem>>, %arg4: memref<1x64xf32, #tpu.memory_space<vmem>>, %arg5: memref<16x64xbf16, #tpu.memory_space<vmem>>) attributes {dimension_semantics = [#tpu.dimension_semantics<parallel>, #tpu.dimension_semantics<parallel>], iteration_bounds = array<i64: 1, 1>, scalar_prefetch = 0 : i64, scratch_operands = 0 : i64, tpu.core_type = #tpu.core_type<tc>, window_params = [{transform_indices = @transform_0, window_bounds = array<i64: 16, 32>}, {transform_indices = @transform_1, window_bounds = array<i64: 32, 64>}, {transform_indices = @transform_2, window_bounds = array<i64: 1, 64>}, {transform_indices = @transform_3, window_bounds = array<i64: 16, 64>}]} {
    %c0 = arith.constant 0 : index
    %c0_0 = arith.constant 0 : index
    %0 = vector.load %arg2[%c0, %c0_0] : memref<16x32xbf16, #tpu.memory_space<vmem>>, vector<16x32xbf16>
    %c0_1 = arith.constant 0 : index
    %c0_2 = arith.constant 0 : index
    %1 = vector.load %arg3[%c0_1, %c0_2] : memref<32x64xbf16, #tpu.memory_space<vmem>>, vector<32x64xbf16>
    %cst = arith.constant dense<0.000000e+00> : vector<16x64xf32>
    %2 = tpu.matmul %0, %1, %cst {dimension_numbers = #tpu.dot_dimension_numbers<[1], [0], [0], [1], [0, 0, 1, 1], [], []>} : vector<16x32xbf16>, vector<32x64xbf16>, vector<16x64xf32> -> vector<16x64xf32>
    %c0_3 = arith.constant 0 : index
    %c0_4 = arith.constant 0 : index
    %3 = vector.load %arg4[%c0_3, %c0_4] : memref<1x64xf32, #tpu.memory_space<vmem>>, vector<1x64xf32>
    %4 = vector.broadcast %3 : vector<1x64xf32> to vector<16x64xf32>
    %5 = arith.addf %2, %4 : vector<16x64xf32>
    %6 = arith.mulf %5, %5 : vector<16x64xf32>
    %cst_5 = arith.constant 5.000000e-01 : f32
    %7 = vector.broadcast %cst_5 : f32 to vector<16x64xf32>
    %8 = arith.mulf %7, %5 : vector<16x64xf32>
    %cst_6 = arith.constant 4.471500e-02 : f32
    %9 = vector.broadcast %cst_6 : f32 to vector<16x64xf32>
    %10 = arith.mulf %9, %6 : vector<16x64xf32>
    %11 = arith.mulf %10, %5 : vector<16x64xf32>
    %12 = arith.addf %5, %11 : vector<16x64xf32>
    %cst_7 = arith.constant 0.797884583 : f32
    %13 = vector.broadcast %cst_7 : f32 to vector<16x64xf32>
    %14 = arith.mulf %13, %12 : vector<16x64xf32>
    %15 = math.tanh %14 : vector<16x64xf32>
    %cst_8 = arith.constant 1.000000e+00 : f32
    %16 = vector.broadcast %cst_8 : f32 to vector<16x64xf32>
    %17 = arith.addf %16, %15 : vector<16x64xf32>
    %18 = arith.mulf %8, %17 : vector<16x64xf32>
    %19 = arith.truncf %18 : vector<16x64xf32> to vector<16x64xbf16>
    %c0_9 = arith.constant 0 : index
    %c0_10 = arith.constant 0 : index
    %20 = vector.load %arg5[%c0_9, %c0_10] : memref<16x64xbf16, #tpu.memory_space<vmem>>, vector<16x64xbf16>
    tpu.vector_store %arg5[%c0_9, %c0_10], %19 {strides = array<i32>} : memref<16x64xbf16, #tpu.memory_space<vmem>>, vector<16x64xbf16>,
    return
  }
  func.func @transform_0(%arg0: i32, %arg1: i32) -> (i32, i32) {
    %c0_i32 = arith.constant 0 : i32
    %c0_i32_0 = arith.constant 0 : i32
    return %arg0, %c0_i32 : i32, i32
  }
  func.func @transform_1(%arg0: i32, %arg1: i32) -> (i32, i32) {
    %c0_i32 = arith.constant 0 : i32
    %c0_i32_0 = arith.constant 0 : i32
    return %c0_i32, %arg1 : i32, i32
  }
  func.func @transform_2(%arg0: i32, %arg1: i32) -> (i32, i32) {
    %c0_i32 = arith.constant 0 : i32
    %c0_i32_0 = arith.constant 0 : i32
    return %c0_i32, %arg1 : i32, i32
  }
  func.func @transform_3(%arg0: i32, %arg1: i32) -> (i32, i32) {
    %c0_i32 = arith.constant 0 : i32
    return %arg0, %arg1 : i32, i32
  }
}

module attributes {stable_mosaic.version = 11 : i64} {
  func.func @_linres_ln_kernel_noacc(%arg0: i32, %arg1: memref<16x64xbf16, #tpu.memory_space<vmem>>, %arg2: memref<64x32xbf16, #tpu.memory_space<vmem>>, %arg3: memref<1x32xf32, #tpu.memory_space<vmem>>, %arg4: memref<16x32xbf16, #tpu.memory_space<vmem>>, %arg5: memref<1x32xf32, #tpu.memory_space<vmem>>, %arg6: memref<1x32xf32, #tpu.memory_space<vmem>>, %arg7: memref<16x32xbf16, #tpu.memory_space<vmem>>) attributes {dimension_semantics = [#tpu.dimension_semantics<parallel>], iteration_bounds = array<i64: 1>, scalar_prefetch = 0 : i64, scratch_operands = 0 : i64, tpu.core_type = #tpu.core_type<tc>, window_params = [{transform_indices = @transform_0, window_bounds = array<i64: 16, 64>}, {pipeline_mode = #tpu.pipeline_mode<synchronous>, transform_indices = @transform_1, window_bounds = array<i64: 64, 32>}, {pipeline_mode = #tpu.pipeline_mode<synchronous>, transform_indices = @transform_2, window_bounds = array<i64: 1, 32>}, {transform_indices = @transform_3, window_bounds = array<i64: 16, 32>}, {pipeline_mode = #tpu.pipeline_mode<synchronous>, transform_indices = @transform_4, window_bounds = array<i64: 1, 32>}, {pipeline_mode = #tpu.pipeline_mode<synchronous>, transform_indices = @transform_5, window_bounds = array<i64: 1, 32>}, {transform_indices = @transform_6, window_bounds = array<i64: 16, 32>}]} {
    %c0 = arith.constant 0 : index
    %c0_0 = arith.constant 0 : index
    %0 = vector.load %arg1[%c0, %c0_0] : memref<16x64xbf16, #tpu.memory_space<vmem>>, vector<16x64xbf16>
    %c0_1 = arith.constant 0 : index
    %c0_2 = arith.constant 0 : index
    %1 = vector.load %arg2[%c0_1, %c0_2] : memref<64x32xbf16, #tpu.memory_space<vmem>>, vector<64x32xbf16>
    %cst = arith.constant dense<0.000000e+00> : vector<16x32xf32>
    %2 = tpu.matmul %0, %1, %cst {dimension_numbers = #tpu.dot_dimension_numbers<[1], [0], [0], [1], [0, 0, 1, 1], [], []>} : vector<16x64xbf16>, vector<64x32xbf16>, vector<16x32xf32> -> vector<16x32xf32>
    %c0_3 = arith.constant 0 : index
    %c0_4 = arith.constant 0 : index
    %3 = vector.load %arg3[%c0_3, %c0_4] : memref<1x32xf32, #tpu.memory_space<vmem>>, vector<1x32xf32>
    %4 = vector.broadcast %3 : vector<1x32xf32> to vector<16x32xf32>
    %5 = arith.addf %2, %4 : vector<16x32xf32>
    %c0_5 = arith.constant 0 : index
    %c0_6 = arith.constant 0 : index
    %6 = vector.load %arg4[%c0_5, %c0_6] : memref<16x32xbf16, #tpu.memory_space<vmem>>, vector<16x32xbf16>
    %7 = arith.extf %6 : vector<16x32xbf16> to vector<16x32xf32>
    %c0_7 = arith.constant 0 : index
    %c0_8 = arith.constant 0 : index
    %8 = vector.load %arg5[%c0_7, %c0_8] : memref<1x32xf32, #tpu.memory_space<vmem>>, vector<1x32xf32>
    %c0_9 = arith.constant 0 : index
    %c0_10 = arith.constant 0 : index
    %9 = vector.load %arg6[%c0_9, %c0_10] : memref<1x32xf32, #tpu.memory_space<vmem>>, vector<1x32xf32>
    %10 = arith.addf %5, %7 : vector<16x32xf32>
    %cst_11 = arith.constant dense<0.000000e+00> : vector<16xf32>
    %11 = vector.multi_reduction <add>, %10, %cst_11 [1] : vector<16x32xf32> to vector<16xf32>
    %12 = vector.shape_cast %11 : vector<16xf32> to vector<16x1xf32>
    %cst_12 = arith.constant 3.200000e+01 : f32
    %13 = vector.broadcast %cst_12 : f32 to vector<16x1xf32>
    %14 = arith.divf %12, %13 : vector<16x1xf32>
    %15 = vector.broadcast %14 : vector<16x1xf32> to vector<16x32xf32>
    %16 = arith.subf %10, %15 : vector<16x32xf32>
    %17 = arith.mulf %16, %16 : vector<16x32xf32>
    %cst_13 = arith.constant dense<0.000000e+00> : vector<16xf32>
    %18 = vector.multi_reduction <add>, %17, %cst_13 [1] : vector<16x32xf32> to vector<16xf32>
    %19 = vector.shape_cast %18 : vector<16xf32> to vector<16x1xf32>
    %cst_14 = arith.constant 3.200000e+01 : f32
    %20 = vector.broadcast %cst_14 : f32 to vector<16x1xf32>
    %21 = arith.divf %19, %20 : vector<16x1xf32>
    %cst_15 = arith.constant 9.99999996E-13 : f32
    %22 = vector.broadcast %cst_15 : f32 to vector<16x1xf32>
    %23 = arith.addf %21, %22 : vector<16x1xf32>
    %24 = math.rsqrt %23 : vector<16x1xf32>
    %25 = vector.broadcast %24 : vector<16x1xf32> to vector<16x32xf32>
    %26 = arith.mulf %16, %25 : vector<16x32xf32>
    %27 = vector.broadcast %8 : vector<1x32xf32> to vector<16x32xf32>
    %28 = arith.mulf %26, %27 : vector<16x32xf32>
    %29 = vector.broadcast %9 : vector<1x32xf32> to vector<16x32xf32>
    %30 = arith.addf %28, %29 : vector<16x32xf32>
    %31 = arith.truncf %30 : vector<16x32xf32> to vector<16x32xbf16>
    %c0_16 = arith.constant 0 : index
    %c0_17 = arith.constant 0 : index
    %32 = vector.load %arg7[%c0_16, %c0_17] : memref<16x32xbf16, #tpu.memory_space<vmem>>, vector<16x32xbf16>
    tpu.vector_store %arg7[%c0_16, %c0_17], %31 {strides = array<i32>} : memref<16x32xbf16, #tpu.memory_space<vmem>>, vector<16x32xbf16>,
    return
  }
  func.func @transform_0(%arg0: i32) -> (i32, i32) {
    %c0_i32 = arith.constant 0 : i32
    %c0_i32_0 = arith.constant 0 : i32
    return %arg0, %c0_i32 : i32, i32
  }
  func.func @transform_1(%arg0: i32) -> (i32, i32) {
    %c0_i32 = arith.constant 0 : i32
    %c0_i32_0 = arith.constant 0 : i32
    %c0_i32_1 = arith.constant 0 : i32
    return %c0_i32, %c0_i32_0 : i32, i32
  }
  func.func @transform_2(%arg0: i32) -> (i32, i32) {
    %c0_i32 = arith.constant 0 : i32
    %c0_i32_0 = arith.constant 0 : i32
    %c0_i32_1 = arith.constant 0 : i32
    return %c0_i32, %c0_i32_0 : i32, i32
  }
  func.func @transform_3(%arg0: i32) -> (i32, i32) {
    %c0_i32 = arith.constant 0 : i32
    %c0_i32_0 = arith.constant 0 : i32
    return %arg0, %c0_i32 : i32, i32
  }
  func.func @transform_4(%arg0: i32) -> (i32, i32) {
    %c0_i32 = arith.constant 0 : i32
    %c0_i32_0 = arith.constant 0 : i32
    %c0_i32_1 = arith.constant 0 : i32
    return %c0_i32, %c0_i32_0 : i32, i32
  }
  func.func @transform_5(%arg0: i32) -> (i32, i32) {
    %c0_i32 = arith.constant 0 : i32
    %c0_i32_0 = arith.constant 0 : i32
    %c0_i32_1 = arith.constant 0 : i32
    return %c0_i32, %c0_i32_0 : i32, i32
  }
  func.func @transform_6(%arg0: i32) -> (i32, i32) {
    %c0_i32 = arith.constant 0 : i32
    %c0_i32_0 = arith.constant 0 : i32
    return %arg0, %c0_i32 : i32, i32
  }
}

module attributes {stable_mosaic.version = 11 : i64} {
  func.func @_small_linear_kernel(%arg0: memref<2x32xbf16, #tpu.memory_space<vmem>>, %arg1: memref<32x128xbf16, #tpu.memory_space<vmem>>, %arg2: memref<1x128xf32, #tpu.memory_space<vmem>>, %arg3: memref<2x128xf32, #tpu.memory_space<vmem>>) attributes {dimension_semantics = [], scalar_prefetch = 0 : i64, scratch_operands = 0 : i64, tpu.core_type = #tpu.core_type<tc>} {
    %c0 = arith.constant 0 : index
    %c0_0 = arith.constant 0 : index
    %0 = vector.load %arg0[%c0, %c0_0] : memref<2x32xbf16, #tpu.memory_space<vmem>>, vector<2x32xbf16>
    %c0_1 = arith.constant 0 : index
    %c0_2 = arith.constant 0 : index
    %1 = vector.load %arg1[%c0_1, %c0_2] : memref<32x128xbf16, #tpu.memory_space<vmem>>, vector<32x128xbf16>
    %cst = arith.constant dense<0.000000e+00> : vector<2x128xf32>
    %2 = tpu.matmul %0, %1, %cst {dimension_numbers = #tpu.dot_dimension_numbers<[1], [0], [0], [1], [0, 0, 1, 1], [], []>} : vector<2x32xbf16>, vector<32x128xbf16>, vector<2x128xf32> -> vector<2x128xf32>
    %c0_3 = arith.constant 0 : index
    %c0_4 = arith.constant 0 : index
    %3 = vector.load %arg2[%c0_3, %c0_4] : memref<1x128xf32, #tpu.memory_space<vmem>>, vector<1x128xf32>
    %4 = vector.broadcast %3 : vector<1x128xf32> to vector<2x128xf32>
    %5 = arith.addf %2, %4 : vector<2x128xf32>
    %c0_5 = arith.constant 0 : index
    %c0_6 = arith.constant 0 : index
    %6 = vector.load %arg3[%c0_5, %c0_6] : memref<2x128xf32, #tpu.memory_space<vmem>>, vector<2x128xf32>
    tpu.vector_store %arg3[%c0_5, %c0_6], %5 {strides = array<i32>} : memref<2x128xf32, #tpu.memory_space<vmem>>, vector<2x128xf32>,
    return
  }
}

</mosaic_0001>

<llo_original>
// kernel: sa_linear_model_forward.15
$region0: #{sa_linear_model_forward.15}
  #allocation0 [shape = 'u32[]', space=smem, size = 0x4, offset = 0x4, fixed_abs, tag = 'smem constant byte address 0x4 - core index']
  #allocation1 [shape = 'u32[144,128]{1,0:T(1,128)}', space=vmem, size = 0x12000, scoped, tag = 'internal scratch']
  %s0 = inlined_call_operand.vmem [shape: bf16[16,32], index: 0, kind: input, shape index: {}]
  %s1 = inlined_call_operand.vmem [shape: bf16[32,32], index: 1, kind: input, shape index: {}]
  %s2 = inlined_call_operand.vmem [shape: f32[1,32], index: 2, kind: input, shape index: {}]
  %s3 = inlined_call_operand.vmem [shape: bf16[16,32], index: 3, kind: input, shape index: {}]
  %s4 = inlined_call_operand.vmem [shape: f32[1,32], index: 4, kind: input, shape index: {}]
  %s5 = inlined_call_operand.vmem [shape: f32[1,32], index: 5, kind: input, shape index: {}]
  %s6 = inlined_call_operand.vmem [shape: bf16[16,32], index: 6, kind: output, shape index: {}]
  %s7 = sld [smem:[#allocation0]]
  $region34: #{sa_linear_model_forward.15} parent=0
    _
  %s9 = ssub.s32 1, %s7
  %s10 = scalar_select 0, %s9, %s7
  // Predicated region
  $region2: #{sa_linear_model_forward.15} parent=0 // pred_check
    _
  $region3: #{sa_linear_model_forward.15} parent=0 // pred_check_branch
    %12 = sbr.rel (0) target = $region5
  $region4: #{sa_linear_model_forward.15} parent=0 // pred_region
    _
  $region5: #{sa_linear_model_forward.15} parent=0 // pred_fallthru
    _
  // Predicated region
  $region6: #{sa_linear_model_forward.15} parent=0 // pred_check
    _
  $region7: #{sa_linear_model_forward.15} parent=0 // pred_check_branch
    %14 = sbr.rel (0) target = $region9
  $region8: #{sa_linear_model_forward.15} parent=0 // pred_region
    _
  $region9: #{sa_linear_model_forward.15} parent=0 // pred_fallthru
    _
  // Predicated region
  $region10: #{sa_linear_model_forward.15} parent=0 // pred_check
    _
  $region11: #{sa_linear_model_forward.15} parent=0 // pred_check_branch
    %16 = sbr.rel (0) target = $region13
  $region12: #{sa_linear_model_forward.15} parent=0 // pred_region
    _
  $region13: #{sa_linear_model_forward.15} parent=0 // pred_fallthru
    _
  // Predicated region
  $region14: #{sa_linear_model_forward.15} parent=0 // pred_check
    _
  $region15: #{sa_linear_model_forward.15} parent=0 // pred_check_branch
    %18 = sbr.rel (0) target = $region17
  $region16: #{sa_linear_model_forward.15} parent=0 // pred_region
    _
  $region17: #{sa_linear_model_forward.15} parent=0 // pred_fallthru
    _
  // Predicated region
  $region18: #{sa_linear_model_forward.15} parent=0 // pred_check
    _
  $region19: #{sa_linear_model_forward.15} parent=0 // pred_check_branch
    %20 = sbr.rel (0) target = $region21
  $region20: #{sa_linear_model_forward.15} parent=0 // pred_region
    _
  $region21: #{sa_linear_model_forward.15} parent=0 // pred_fallthru
    _
  // Predicated region
  $region22: #{sa_linear_model_forward.15} parent=0 // pred_check
    _
  $region23: #{sa_linear_model_forward.15} parent=0 // pred_check_branch
    %22 = sbr.rel (0) target = $region25
  $region24: #{sa_linear_model_forward.15} parent=0 // pred_region
    _
  $region25: #{sa_linear_model_forward.15} parent=0 // pred_fallthru
    _
  %v24 = vld [vmem:[%s0] sm:$0xf]
  %v25 = vld [vmem:[%s0 + $0x4] sm:$0xf]
  %v26 = vld [vmem:[%s1] sm:$0xf]
  %v27 = vld [vmem:[%s1 + $0x4] sm:$0xf]
  %v28 = vld [vmem:[%s1 + $0x8] sm:$0xf]
  %v29 = vld [vmem:[%s1 + $0xc] sm:$0xf]
  %v30 = vld [vmem:[%s2] sm:$0x1]
  %v32 = vlaneseq
  %v33 = vshrl.u32 %v32, 7
  %v34 = vsub.s32 0, %v33
  %v35 = vrot.slane %v30, %v34
  %v39 = vunpack.c.l.b16 %v24
  %v40 = vunpack.c.l.b16 %v25
  %v41 = vpack.c.b16 %v40, %v39
  %v46 = vunpack.c.l.b16 %v26
  %v47 = vunpack.c.l.b16 %v27
  %v48 = vunpack.c.l.b16 %v28
  %v49 = vunpack.c.l.b16 %v29
  %v50 = vpack.c.b16 %v47, %v46
  %v51 = vpack.c.b16 %v49, %v48
  %vm54 = vcmask 261120
  %v56 = vsel %vm54, %v41, 0
  %58 = vmatprep.subr.bf16.mxu0 0
  %59 = vmatpush1.bf16.msra.mxu0 %v50
  %60 = vmatprep.subr.bf16.mxu0 0
  %61 = vmatpush1.bf16.msra.mxu0 %v51
  %62 = vmatprep.subr.bf16.mxu0 0
  %63 = vmatpush1.bf16.msra.mxu0 0
  %64 = vmatprep.subr.bf16.mxu0 0
  %65 = vmatpush1.bf16.msra.mxu0 0
  %66 = vmatprep.subr.bf16.mxu0 0
  %67 = vmatpush1.bf16.msra.mxu0 0
  %68 = vmatprep.subr.bf16.mxu0 0
  %69 = vmatpush1.bf16.msra.mxu0 0
  %70 = vmatprep.subr.bf16.mxu0 0
  %71 = vmatpush1.bf16.msra.mxu0 0
  %72 = vmatprep.subr.bf16.mxu0 0
  %73 = vmatpush1.bf16.msra.mxu0 0
  %74 = vmatprep.subr.bf16.mxu0 0
  %75 = vmatpush1.bf16.msra.mxu0 0
  %76 = vmatprep.subr.bf16.mxu0 0
  %77 = vmatpush1.bf16.msra.mxu0 0
  %78 = vmatprep.subr.bf16.mxu0 0
  %79 = vmatpush1.bf16.msra.mxu0 0
  %80 = vmatprep.subr.bf16.mxu0 0
  %81 = vmatpush1.bf16.msra.mxu0 0
  %82 = vmatprep.subr.bf16.mxu0 0
  %83 = vmatpush1.bf16.msra.mxu0 0
  %84 = vmatprep.subr.bf16.mxu0 0
  %85 = vmatpush1.bf16.msra.mxu0 0
  %86 = vmatprep.subr.bf16.mxu0 0
  %87 = vmatpush1.bf16.msra.mxu0 0
  %88 = vmatprep.subr.bf16.mxu0 0
  %89 = vmatpush1.bf16.msra.mxu0 0
  %90 = vmatprep.mubr.bf16.mxu0 0
  %91 = vmatmul.mubr.bf16.gmra.mrb[0].mxu0 %v56
  %v92 = vpop.f32.mrb[0].mxu0
  %v93 = vadd.f32 %v35, %v92
  %v94 = vpop.f32.mrb[0].mxu0
  %v95 = vpop.f32.mrb[0].mxu0
  %v96 = vadd.f32 %v35, %v95
  %v97 = vpop.f32.mrb[0].mxu0
  %98 = vdwg.mxu0
  %v99 = vld [vmem:[%s3] sm:$0xf]
  %v100 = vld [vmem:[%s3 + $0x4] sm:$0xf]
  %v101 = vunpack.c.l.bf16 %v99
  %v102 = vunpack.c.l.bf16 %v100
  %v103 = vld [vmem:[%s4] sm:$0x1]
  %v104 = vld [vmem:[%s5] sm:$0x1]
  %v105 = vadd.f32 %v93, %v101
  %v106 = vadd.f32 %v96, %v102
  %v107 = vsel %vm54, %v105, 0.0
  %108 = vadd.xlane.f32.xlu0 %v107
  %v109 = vpop.xlane.xlu0 %108
  %v110 = vsel %vm54, %v106, 0.0
  %111 = vadd.xlane.f32.xlu0 %v110
  %v112 = vpop.xlane.xlu0 %111
  %v113 = vrcp.pop 32.0
  %v114 = vmul.f32 %v109, %v113
  %v115 = vmul.f32 %v112, %v113
  %v116 = vsub.f32 %v105, %v114
  %v117 = vsub.f32 %v106, %v115
  %v118 = vmul.f32 %v116, %v116
  %v119 = vmul.f32 %v117, %v117
  %v120 = vsel %vm54, %v118, 0.0
  %121 = vadd.xlane.f32.xlu0 %v120
  %v122 = vpop.xlane.xlu0 %121
  %v123 = vsel %vm54, %v119, 0.0
  %124 = vadd.xlane.f32.xlu0 %v123
  %v125 = vpop.xlane.xlu0 %124
  %v126 = vmul.f32 %v122, %v113
  %v127 = vmul.f32 %v125, %v113
  %v128 = vadd.f32 %v126, 1e-12
  %v129 = vadd.f32 %v127, 1e-12
  %v130 = vrsqrt.pop %v128
  %v131 = vrsqrt.pop %v129
  %v132 = vmul.f32 %v116, %v130
  %v133 = vmul.f32 %v117, %v131
  %v135 = vlaneseq
  %v136 = vshrl.u32 %v135, 7
  %v137 = vsub.s32 0, %v136
  %v138 = vrot.slane %v103, %v137
  %v140 = vmul.f32 %v132, %v138
  %v141 = vmul.f32 %v133, %v138
  %v143 = vlaneseq
  %v144 = vshrl.u32 %v143, 7
  %v145 = vsub.s32 0, %v144
  %v146 = vrot.slane %v104, %v145
  %v148 = vadd.f32 %v140, %v146
  %v149 = vadd.f32 %v141, %v146
  %v150 = vpack.c.bf16 %v149, %v148
  %v152 = vunpack.c.l.b16 %v150
  %v153 = vunpack.c.h.b16 %v150
  %v154 = vpack.c.b16 %v152, %v152
  %v155 = vpack.c.b16 %v153, %v153
  %vm158 = vcmask 257024
  %159 = vst.msk [vmem:[%s6] sm:$0xf] %vm158, %v154
  %160 = vst.msk [vmem:[%s6 + $0x4] sm:$0xf] %vm158, %v155
  // Predicated region
  $region26: #{sa_linear_model_forward.15} parent=0 // pred_check
    _
  $region27: #{sa_linear_model_forward.15} parent=0 // pred_check_branch
    %162 = sbr.rel (0) target = $region29
  $region28: #{sa_linear_model_forward.15} parent=0 // pred_region
    _
  $region29: #{sa_linear_model_forward.15} parent=0 // pred_fallthru
    _
  // Predicated region
  $region30: #{sa_linear_model_forward.15} parent=0 // pred_check
    _
  $region31: #{sa_linear_model_forward.15} parent=0 // pred_check_branch
    %164 = sbr.rel (0) target = $region33
  $region32: #{sa_linear_model_forward.15} parent=0 // pred_region
    _
  $region33: #{sa_linear_model_forward.15} parent=0 // pred_fallthru
    _

// kernel: sa_linear_model_forward.13
$region0: #{sa_linear_model_forward.13}
  #allocation0 [shape = 'u32[]', space=smem, size = 0x4, offset = 0x4, fixed_abs, tag = 'smem constant byte address 0x4 - core index']
  #allocation1 [shape = 'u32[144,128]{1,0:T(1,128)}', space=vmem, size = 0x12000, scoped, tag = 'internal scratch']
  %s0 = inlined_call_operand.vmem [shape: bf16[16,32], index: 0, kind: input, shape index: {}]
  %s1 = inlined_call_operand.vmem [shape: bf16[32,96], index: 1, kind: input, shape index: {}]
  %s2 = inlined_call_operand.vmem [shape: f32[1,96], index: 2, kind: input, shape index: {}]
  %s3 = inlined_call_operand.vmem [shape: bf16[16,96], index: 3, kind: output, shape index: {}]
  %s4 = sld [smem:[#allocation0]]
  $region22: #{sa_linear_model_forward.13} parent=0
    _
  %s6 = ssub.s32 1, %s4
  %s7 = scalar_select 0, %s6, %s4
  // Predicated region
  $region2: #{sa_linear_model_forward.13} parent=0 // pred_check
    _
  $region3: #{sa_linear_model_forward.13} parent=0 // pred_check_branch
    %9 = sbr.rel (0) target = $region5
  $region4: #{sa_linear_model_forward.13} parent=0 // pred_region
    _
  $region5: #{sa_linear_model_forward.13} parent=0 // pred_fallthru
    _
  // Predicated region
  $region6: #{sa_linear_model_forward.13} parent=0 // pred_check
    _
  $region7: #{sa_linear_model_forward.13} parent=0 // pred_check_branch
    %11 = sbr.rel (0) target = $region9
  $region8: #{sa_linear_model_forward.13} parent=0 // pred_region
    _
  $region9: #{sa_linear_model_forward.13} parent=0 // pred_fallthru
    _
  // Predicated region
  $region10: #{sa_linear_model_forward.13} parent=0 // pred_check
    _
  $region11: #{sa_linear_model_forward.13} parent=0 // pred_check_branch
    %13 = sbr.rel (0) target = $region13
  $region12: #{sa_linear_model_forward.13} parent=0 // pred_region
    _
  $region13: #{sa_linear_model_forward.13} parent=0 // pred_fallthru
    _
  %v15 = vld [vmem:[%s0] sm:$0xf]
  %v16 = vld [vmem:[%s0 + $0x4] sm:$0xf]
  %v17 = vld [vmem:[%s1] sm:$0xf]
  %v18 = vld [vmem:[%s1 + $0x4] sm:$0xf]
  %v19 = vld [vmem:[%s1 + $0x8] sm:$0xf]
  %v20 = vld [vmem:[%s1 + $0xc] sm:$0xf]
  %v21 = vld [vmem:[%s2] sm:$0x1]
  %v23 = vlaneseq
  %v24 = vshrl.u32 %v23, 7
  %v25 = vsub.s32 0, %v24
  %v26 = vrot.slane %v21, %v25
  %v30 = vunpack.c.l.b16 %v15
  %v31 = vunpack.c.l.b16 %v16
  %v32 = vpack.c.b16 %v31, %v30
  %v37 = vunpack.c.l.b16 %v17
  %v38 = vunpack.c.l.b16 %v18
  %v39 = vunpack.c.l.b16 %v19
  %v40 = vunpack.c.l.b16 %v20
  %v41 = vpack.c.b16 %v38, %v37
  %v42 = vpack.c.b16 %v40, %v39
  %vm45 = vcmask 261120
  %v47 = vsel %vm45, %v32, 0
  %49 = vmatprep.subr.bf16.mxu0 0
  %50 = vmatpush1.bf16.msra.mxu0 %v41
  %51 = vmatprep.subr.bf16.mxu0 0
  %52 = vmatpush1.bf16.msra.mxu0 %v42
  %53 = vmatprep.subr.bf16.mxu0 0
  %54 = vmatpush1.bf16.msra.mxu0 0
  %55 = vmatprep.subr.bf16.mxu0 0
  %56 = vmatpush1.bf16.msra.mxu0 0
  %57 = vmatprep.subr.bf16.mxu0 0
  %58 = vmatpush1.bf16.msra.mxu0 0
  %59 = vmatprep.subr.bf16.mxu0 0
  %60 = vmatpush1.bf16.msra.mxu0 0
  %61 = vmatprep.subr.bf16.mxu0 0
  %62 = vmatpush1.bf16.msra.mxu0 0
  %63 = vmatprep.subr.bf16.mxu0 0
  %64 = vmatpush1.bf16.msra.mxu0 0
  %65 = vmatprep.subr.bf16.mxu0 0
  %66 = vmatpush1.bf16.msra.mxu0 0
  %67 = vmatprep.subr.bf16.mxu0 0
  %68 = vmatpush1.bf16.msra.mxu0 0
  %69 = vmatprep.subr.bf16.mxu0 0
  %70 = vmatpush1.bf16.msra.mxu0 0
  %71 = vmatprep.subr.bf16.mxu0 0
  %72 = vmatpush1.bf16.msra.mxu0 0
  %73 = vmatprep.subr.bf16.mxu0 0
  %74 = vmatpush1.bf16.msra.mxu0 0
  %75 = vmatprep.subr.bf16.mxu0 0
  %76 = vmatpush1.bf16.msra.mxu0 0
  %77 = vmatprep.subr.bf16.mxu0 0
  %78 = vmatpush1.bf16.msra.mxu0 0
  %79 = vmatprep.subr.bf16.mxu0 0
  %80 = vmatpush1.bf16.msra.mxu0 0
  %81 = vmatprep.mubr.bf16.mxu0 0
  %82 = vmatmul.mubr.bf16.gmra.mrb[0].mxu0 %v47
  %v83 = vpop.f32.mrb[0].mxu0
  %v84 = vadd.f32 %v26, %v83
  %v85 = vpop.f32.mrb[0].mxu0
  %v86 = vpop.f32.mrb[0].mxu0
  %v87 = vadd.f32 %v26, %v86
  %v88 = vpop.f32.mrb[0].mxu0
  %89 = vdwg.mxu0
  %v90 = vpack.c.bf16 %v87, %v84
  %v92 = vunpack.c.l.b16 %v90
  %v93 = vunpack.c.h.b16 %v90
  %v94 = vpack.c.b16 %v92, %v92
  %v95 = vpack.c.b16 %v93, %v93
  %vm98 = vcmask 781312
  %99 = vst.msk [vmem:[%s3] sm:$0xf] %vm98, %v94
  %100 = vst.msk [vmem:[%s3 + $0x4] sm:$0xf] %vm98, %v95
  // Predicated region
  $region14: #{sa_linear_model_forward.13} parent=0 // pred_check
    _
  $region15: #{sa_linear_model_forward.13} parent=0 // pred_check_branch
    %102 = sbr.rel (0) target = $region17
  $region16: #{sa_linear_model_forward.13} parent=0 // pred_region
    _
  $region17: #{sa_linear_model_forward.13} parent=0 // pred_fallthru
    _
  // Predicated region
  $region18: #{sa_linear_model_forward.13} parent=0 // pred_check
    _
  $region19: #{sa_linear_model_forward.13} parent=0 // pred_check_branch
    %104 = sbr.rel (0) target = $region21
  $region20: #{sa_linear_model_forward.13} parent=0 // pred_region
    _
  $region21: #{sa_linear_model_forward.13} parent=0 // pred_fallthru
    _

// kernel: sa_linear_model_forward.12
$region0: #{sa_linear_model_forward.12}
  #allocation0 [shape = 'u32[]', space=smem, size = 0x4, offset = 0x4, fixed_abs, tag = 'smem constant byte address 0x4 - core index']
  #allocation1 [shape = 'u32[144,128]{1,0:T(1,128)}', space=vmem, size = 0x12000, scoped, tag = 'internal scratch']
  %s0 = inlined_call_operand.vmem [shape: bf16[16,32], index: 0, kind: input, shape index: {}]
  %s1 = inlined_call_operand.vmem [shape: f32[1,32], index: 1, kind: input, shape index: {}]
  %s2 = inlined_call_operand.vmem [shape: f32[1,32], index: 2, kind: input, shape index: {}]
  %s3 = inlined_call_operand.vmem [shape: bf16[16,32], index: 3, kind: output, shape index: {}]
  %s4 = sld [smem:[#allocation0]]
  $region22: #{sa_linear_model_forward.12} parent=0
    _
  %s6 = ssub.s32 1, %s4
  %s7 = scalar_select 0, %s6, %s4
  // Predicated region
  $region2: #{sa_linear_model_forward.12} parent=0 // pred_check
    _
  $region3: #{sa_linear_model_forward.12} parent=0 // pred_check_branch
    %9 = sbr.rel (0) target = $region5
  $region4: #{sa_linear_model_forward.12} parent=0 // pred_region
    _
  $region5: #{sa_linear_model_forward.12} parent=0 // pred_fallthru
    _
  // Predicated region
  $region6: #{sa_linear_model_forward.12} parent=0 // pred_check
    _
  $region7: #{sa_linear_model_forward.12} parent=0 // pred_check_branch
    %11 = sbr.rel (0) target = $region9
  $region8: #{sa_linear_model_forward.12} parent=0 // pred_region
    _
  $region9: #{sa_linear_model_forward.12} parent=0 // pred_fallthru
    _
  // Predicated region
  $region10: #{sa_linear_model_forward.12} parent=0 // pred_check
    _
  $region11: #{sa_linear_model_forward.12} parent=0 // pred_check_branch
    %13 = sbr.rel (0) target = $region13
  $region12: #{sa_linear_model_forward.12} parent=0 // pred_region
    _
  $region13: #{sa_linear_model_forward.12} parent=0 // pred_fallthru
    _
  %v14 = vld [vmem:[%s0] sm:$0xf]
  %v15 = vld [vmem:[%s0 + $0x4] sm:$0xf]
  %v16 = vunpack.c.l.bf16 %v14
  %v17 = vunpack.c.l.bf16 %v15
  %vm18 = vcmask 261120
  %v19 = vsel %vm18, %v16, 0.0
  %20 = vadd.xlane.f32.xlu0 %v19
  %v21 = vpop.xlane.xlu0 %20
  %v22 = vsel %vm18, %v17, 0.0
  %23 = vadd.xlane.f32.xlu0 %v22
  %v24 = vpop.xlane.xlu0 %23
  %v25 = vrcp.pop 32.0
  %v26 = vmul.f32 %v21, %v25
  %v27 = vmul.f32 %v24, %v25
  %v28 = vsub.f32 %v16, %v26
  %v29 = vsub.f32 %v17, %v27
  %v30 = vmul.f32 %v28, %v28
  %v31 = vmul.f32 %v29, %v29
  %v32 = vsel %vm18, %v30, 0.0
  %33 = vadd.xlane.f32.xlu0 %v32
  %v34 = vpop.xlane.xlu0 %33
  %v35 = vsel %vm18, %v31, 0.0
  %36 = vadd.xlane.f32.xlu0 %v35
  %v37 = vpop.xlane.xlu0 %36
  %v38 = vmul.f32 %v34, %v25
  %v39 = vmul.f32 %v37, %v25
  %v40 = vadd.f32 %v38, 1e-12
  %v41 = vadd.f32 %v39, 1e-12
  %v42 = vrsqrt.pop %v40
  %v43 = vrsqrt.pop %v41
  %v44 = vmul.f32 %v28, %v42
  %v45 = vmul.f32 %v29, %v43
  %v46 = vld [vmem:[%s1] sm:$0x1]
  %v48 = vlaneseq
  %v49 = vshrl.u32 %v48, 7
  %v50 = vsub.s32 0, %v49
  %v51 = vrot.slane %v46, %v50
  %v53 = vmul.f32 %v44, %v51
  %v54 = vmul.f32 %v45, %v51
  %v55 = vld [vmem:[%s2] sm:$0x1]
  %v57 = vlaneseq
  %v58 = vshrl.u32 %v57, 7
  %v59 = vsub.s32 0, %v58
  %v60 = vrot.slane %v55, %v59
  %v62 = vadd.f32 %v53, %v60
  %v63 = vadd.f32 %v54, %v60
  %v64 = vpack.c.bf16 %v63, %v62
  %v66 = vunpack.c.l.b16 %v64
  %v67 = vunpack.c.h.b16 %v64
  %v68 = vpack.c.b16 %v66, %v66
  %v69 = vpack.c.b16 %v67, %v67
  %vm72 = vcmask 257024
  %73 = vst.msk [vmem:[%s3] sm:$0xf] %vm72, %v68
  %74 = vst.msk [vmem:[%s3 + $0x4] sm:$0xf] %vm72, %v69
  // Predicated region
  $region14: #{sa_linear_model_forward.12} parent=0 // pred_check
    _
  $region15: #{sa_linear_model_forward.12} parent=0 // pred_check_branch
    %76 = sbr.rel (0) target = $region17
  $region16: #{sa_linear_model_forward.12} parent=0 // pred_region
    _
  $region17: #{sa_linear_model_forward.12} parent=0 // pred_fallthru
    _
  // Predicated region
  $region18: #{sa_linear_model_forward.12} parent=0 // pred_check
    _
  $region19: #{sa_linear_model_forward.12} parent=0 // pred_check_branch
    %78 = sbr.rel (0) target = $region21
  $region20: #{sa_linear_model_forward.12} parent=0 // pred_region
    _
  $region21: #{sa_linear_model_forward.12} parent=0 // pred_fallthru
    _

// kernel: sa_linear_model_forward.14
$region0: #{sa_linear_model_forward.14}
  #allocation0 [shape = 'u32[]', space=smem, size = 0x4, offset = 0x4, fixed_abs, tag = 'smem constant byte address 0x4 - core index']
  #allocation1 [shape = 'u32[144,128]{1,0:T(1,128)}', space=vmem, size = 0x12000, scoped, tag = 'internal scratch']
  %s0 = inlined_call_operand.vmem [shape: bf16[2,8,96], index: 0, kind: input, shape index: {}]
  %s1 = inlined_call_operand.vmem [shape: f32[2,1,8], index: 1, kind: input, shape index: {}]
  %s2 = inlined_call_operand.vmem [shape: bf16[2,8,32], index: 2, kind: output, shape index: {}]
  %s3 = sld [smem:[#allocation0]]
  $region41: #{sa_linear_model_forward.14} parent=0
    _
  %s5 = ssub.s32 1, %s3
  %s6 = scalar_select 0, %s5, %s3
  loop: start=0, step=1, limit=4
  $region2: #{sa_linear_model_forward.14} parent=0 // loop_pre_header
    _
  $region3: #{sa_linear_model_forward.14} parent=0 // loop_header
    %s8 = sphi 0, %s12
    %p9 = scmp.ge.s32.totalorder %s8, 4
    %s15 = sphi 0, %s27
    %s16 = sphi 0, %s23
    %s17 = sphi 0, %s15
    %s18 = sphi 0, %s16
    %s19 = sphi 0, %s17
    %s20 = sphi 0, %s18
    %s32 = sphi 0, %s34
    %s35 = sphi 0, %s32
    %s36 = sphi 0, %s35
    %s52 = sphi 0, %s36
    %s58 = sphi 0, %s60
    %s61 = sphi 0, %s58
    %s62 = sphi 0, %s61
    %s78 = sphi 0, %s62
    %s86 = sphi 0, %s88
    %s89 = sphi 0, %s86
    %s90 = sphi 0, %s89
    %s106 = sphi 0, %s90
  $region4: #{sa_linear_model_forward.14} parent=0 // loop_header_branch
    %11 = sbr.rel (%p9) target = $region8
  $region5: #{sa_linear_model_forward.14} parent=0 // loop_body
    %s13 = ssub.s32 %s8, 1
    %s14 = ssub.s32 %s8, 2
    %s21 = sadd.s32 1, %s16
    %p22 = scmp.ge.s32.totalorder %s21, 1
    %s23 = scalar_select %p22, 0, %s21
    %s24 = sadd.s32 1, %s15
    %s25 = scalar_select %p22, %s24, %s15
    %p26 = scmp.ge.s32.totalorder %s25, 2
    %s27 = scalar_select %p26, 0, %s25
    %s28 = ssub.s32 %s15, %s27
    %s29 = ssub.s32 %s16, %s23
    %s30 = sor.u32 %s28, %s29
    %p31 = scmp.eq.s32.totalorder %s30, 0
    %s33 = sadd.s32 %s32, 1
    %s34 = scalar_select %p31, %s32, %s33
    %p37 = pneg %p31
    %p38 = scmp.eq.s32.totalorder %s8, 1
    %p39 = por %p37, %p38
    %p40 = scmp.ne.s32.totalorder %s32, %s35
    %p41 = scmp.eq.s32.totalorder %s8, 0
    %p42 = por %p40, %p41
    %p43 = scmp.ne.s32.totalorder %s32, %s35
    %p44 = scmp.eq.s32.totalorder %s13, 1
    %p45 = por %p43, %p44
    %p46 = scmp.ne.s32.totalorder %s35, %s36
    %p47 = scmp.eq.s32.totalorder %s13, 0
    %p48 = por %p46, %p47
    %p49 = scmp.ne.s32.totalorder %s35, %s36
    %p50 = scmp.eq.s32.totalorder %s14, 1
    %p51 = por %p49, %p50
    %p53 = scmp.ne.s32.totalorder %s36, %s52
    %p54 = scmp.eq.s32.totalorder %s14, 0
    %p55 = por %p53, %p54
    %s56 = ssub.s32 %s15, %s27
    %p57 = scmp.eq.s32.totalorder %s56, 0
    %s59 = sadd.s32 %s58, 1
    %s60 = scalar_select %p57, %s58, %s59
    %p63 = pneg %p57
    %p64 = scmp.eq.s32.totalorder %s8, 1
    %p65 = por %p63, %p64
    %p66 = scmp.ne.s32.totalorder %s58, %s61
    %p67 = scmp.eq.s32.totalorder %s8, 0
    %p68 = por %p66, %p67
    %p69 = scmp.ne.s32.totalorder %s58, %s61
    %p70 = scmp.eq.s32.totalorder %s13, 1
    %p71 = por %p69, %p70
    %p72 = scmp.ne.s32.totalorder %s61, %s62
    %p73 = scmp.eq.s32.totalorder %s13, 0
    %p74 = por %p72, %p73
    %p75 = scmp.ne.s32.totalorder %s61, %s62
    %p76 = scmp.eq.s32.totalorder %s14, 1
    %p77 = por %p75, %p76
    %p79 = scmp.ne.s32.totalorder %s62, %s78
    %p80 = scmp.eq.s32.totalorder %s14, 0
    %p81 = por %p79, %p80
    %s82 = ssub.s32 %s15, %s27
    %s83 = ssub.s32 %s16, %s23
    %s84 = sor.u32 %s82, %s83
    %p85 = scmp.eq.s32.totalorder %s84, 0
    %s87 = sadd.s32 %s86, 1
    %s88 = scalar_select %p85, %s86, %s87
    %p91 = pneg %p85
    %p92 = scmp.eq.s32.totalorder %s8, 1
    %p93 = por %p91, %p92
    %p94 = scmp.ne.s32.totalorder %s86, %s89
    %p95 = scmp.eq.s32.totalorder %s8, 0
    %p96 = por %p94, %p95
    %p97 = scmp.ne.s32.totalorder %s86, %s89
    %p98 = scmp.eq.s32.totalorder %s13, 1
    %p99 = por %p97, %p98
    %p100 = scmp.ne.s32.totalorder %s89, %s90
    %p101 = scmp.eq.s32.totalorder %s13, 0
    %p102 = por %p100, %p101
    %p103 = scmp.ne.s32.totalorder %s89, %s90
    %p104 = scmp.eq.s32.totalorder %s14, 1
    %p105 = por %p103, %p104
    %p107 = scmp.ne.s32.totalorder %s90, %s106
    %p108 = scmp.eq.s32.totalorder %s14, 0
    %p109 = por %p107, %p108
    %p110 = scmp.le.s32.totalorder 1, %s8
    %p111 = scmp.lt.s32.totalorder %s8, 3
    %p112 = pnand %p110, %p111
    %p113 = pneg %p112
    // Predicated region
    $region9: #{sa_linear_model_forward.14} parent=5 // pred_check
      _
    $region10: #{sa_linear_model_forward.14} parent=5 // pred_check_branch
      %115 = sbr.rel (%p112) target = $region12
    $region11: #{sa_linear_model_forward.14} parent=5 // pred_region
      %s116 = ssub.s32 %s8, 1
    $region12: #{sa_linear_model_forward.14} parent=5 // pred_fallthru
      _
    %p117 = scmp.lt.s32.totalorder %s8, 2
    // Predicated region
    $region13: #{sa_linear_model_forward.14} parent=5 // pred_check
      %p118 = pneg %p117
    $region14: #{sa_linear_model_forward.14} parent=5 // pred_check_branch
      %120 = sbr.rel (%p118) target = $region16
    $region15: #{sa_linear_model_forward.14} parent=5 // pred_region
      // Predicated region
      $region17: #{sa_linear_model_forward.14} parent=15 // pred_check
        %p121 = pneg %p42
      $region18: #{sa_linear_model_forward.14} parent=15 // pred_check_branch
        %123 = sbr.rel (%p121) target = $region20
      $region19: #{sa_linear_model_forward.14} parent=15 // pred_region
        %p124 = scmp.lt.s32.totalorder %s15, 1
        %s125 = scalar_select %p124, %s15, 1
        %p126 = scmp.lt.s32.totalorder %s16, 0
        %s127 = scalar_select %p126, %s16, 0
        %s128 = sadd.s32 %s127, %s125
        %s129 = smul.addr %s128, 4
        %s130 = scalar_lea.vmem %s0, %s129
      $region20: #{sa_linear_model_forward.14} parent=15 // pred_fallthru
        _
      // Predicated region
      $region21: #{sa_linear_model_forward.14} parent=15 // pred_check
        %p131 = pneg %p68
      $region22: #{sa_linear_model_forward.14} parent=15 // pred_check_branch
        %133 = sbr.rel (%p131) target = $region24
      $region23: #{sa_linear_model_forward.14} parent=15 // pred_region
        %p134 = scmp.lt.s32.totalorder %s15, 1
        %s135 = scalar_select %p134, %s15, 1
        %s136 = scalar_lea.vmem %s1, %s135
      $region24: #{sa_linear_model_forward.14} parent=15 // pred_fallthru
        _
    $region16: #{sa_linear_model_forward.14} parent=5 // pred_fallthru
      _
    %p137 = scmp.le.s32.totalorder 1, %s8
    %p138 = scmp.lt.s32.totalorder %s8, 3
    %p139 = pnand %p137, %p138
    %p140 = pneg %p139
    // Predicated region
    $region25: #{sa_linear_model_forward.14} parent=5 // pred_check
      _
    $region26: #{sa_linear_model_forward.14} parent=5 // pred_check_branch
      %142 = sbr.rel (%p139) target = $region28
    $region27: #{sa_linear_model_forward.14} parent=5 // pred_region
      %s143 = ssub.s32 %s8, 1
      %p144 = scmp.lt.s32.totalorder %s17, 1
      %s145 = scalar_select %p144, %s17, 1
      %p146 = scmp.lt.s32.totalorder %s18, 0
      %s147 = scalar_select %p146, %s18, 0
      %s148 = sadd.s32 %s147, %s145
      %s149 = smul.addr %s148, 4
      %s150 = scalar_lea.vmem %s0, %s149
      %p151 = pneg %p48
      %p152 = pneg %p45
      %p153 = scmp.lt.s32.totalorder %s17, 1
      %s154 = scalar_select %p153, %s17, 1
      %s155 = scalar_lea.vmem %s1, %s154
      %p156 = pneg %p74
      %p157 = pneg %p71
      %p158 = pneg %p102
      %p159 = pneg %p99
      %p160 = scmp.lt.s32.totalorder %s17, 1
      %s161 = scalar_select %p160, %s17, 1
      %p162 = scmp.lt.s32.totalorder %s18, 0
      %s163 = scalar_select %p162, %s18, 0
      %s164 = sadd.s32 %s163, %s161
      %s165 = smul.addr %s164, 4
      %s166 = scalar_lea.vmem %s2, %s165
      %p167 = scmp.lt.s32.totalorder %s17, 1
      %s168 = scalar_select %p167, %s17, 1
      %p169 = scmp.lt.s32.totalorder %s18, 0
      %s170 = scalar_select %p169, %s18, 0
      %s171 = sadd.s32 %s170, %s168
      %s172 = smul.addr %s171, 4
      %s173 = scalar_lea.vmem %s0, %s172
      %p174 = scmp.lt.s32.totalorder %s17, 1
      %s175 = scalar_select %p174, %s17, 1
      %s176 = scalar_lea.vmem %s1, %s175
      %p177 = scmp.lt.s32.totalorder %s17, 1
      %s178 = scalar_select %p177, %s17, 1
      %p179 = scmp.lt.s32.totalorder %s18, 0
      %s180 = scalar_select %p179, %s18, 0
      %s181 = sadd.s32 %s180, %s178
      %s182 = smul.addr %s181, 4
      %s183 = scalar_lea.vmem %s2, %s182
      %v185 = vld [vmem:[%s173] sm:$0xf]
      %v186 = vld [vmem:[%s176] sm:$0x1]
      %v188 = vlaneseq
      %v189 = vshrl.u32 %v188, 7
      %v190 = vsub.s32 0, %v189
      %v191 = vrot.slane %v186, %v190
      %v194 = vunpack.c.l.b16 %v185
      %v195 = vpack.c.b16 %v194, %v194
      %196 = vrot.lane.b32.xlu0 %v195, 96
      %v197 = vpop.permute.xlu0 %196
      %vm198 = vcmask 64512
      %v200 = vsel %vm198, %v185, 0
      %v203 = vsel %vm198, %v197, 0
      %205 = vmatprep.subr.bf16.mxu0 0
      %206 = vmatpush1.bf16.xpose.msra.mxu0 %v203
      %207 = vmatprep.subr.bf16.mxu0 0
      %208 = vmatpush1.bf16.xpose.msra.mxu0 0
      %209 = vmatprep.subr.bf16.mxu0 0
      %210 = vmatpush1.bf16.xpose.msra.mxu0 0
      %211 = vmatprep.subr.bf16.mxu0 0
      %212 = vmatpush1.bf16.xpose.msra.mxu0 0
      %213 = vmatprep.subr.bf16.mxu0 0
      %214 = vmatpush1.bf16.xpose.msra.mxu0 0
      %215 = vmatprep.subr.bf16.mxu0 0
      %216 = vmatpush1.bf16.xpose.msra.mxu0 0
      %217 = vmatprep.subr.bf16.mxu0 0
      %218 = vmatpush1.bf16.xpose.msra.mxu0 0
      %219 = vmatprep.subr.bf16.mxu0 0
      %220 = vmatpush1.bf16.xpose.msra.mxu0 0
      %221 = vmatprep.subr.bf16.mxu0 0
      %222 = vmatpush1.bf16.xpose.msra.mxu0 0
      %223 = vmatprep.subr.bf16.mxu0 0
      %224 = vmatpush1.bf16.xpose.msra.mxu0 0
      %225 = vmatprep.subr.bf16.mxu0 0
      %226 = vmatpush1.bf16.xpose.msra.mxu0 0
      %227 = vmatprep.subr.bf16.mxu0 0
      %228 = vmatpush1.bf16.xpose.msra.mxu0 0
      %229 = vmatprep.subr.bf16.mxu0 0
      %230 = vmatpush1.bf16.xpose.msra.mxu0 0
      %231 = vmatprep.subr.bf16.mxu0 0
      %232 = vmatpush1.bf16.xpose.msra.mxu0 0
      %233 = vmatprep.subr.bf16.mxu0 0
      %234 = vmatpush1.bf16.xpose.msra.mxu0 0
      %235 = vmatprep.subr.bf16.mxu0 0
      %236 = vmatpush1.bf16.xpose.msra.mxu0 0
      %237 = vmatprep.mubr.bf16.mxu0 0
      %238 = vmatmul.mubr.bf16.gmra.mrb[0].mxu0 %v200
      %v239 = vpop.f32.mrb[0].mxu0
      %v240 = vadd.f32 %v191, %v239
      %v241 = vpop.f32.mrb[0].mxu0
      %v242 = vpop.f32.mrb[0].mxu0
      %v243 = vpop.f32.mrb[0].mxu0
      %244 = vdwg.mxu0
      %v245 = vsel %vm198, %v240, -inf
      %246 = vmax.xlane.f32.xlu0 %v245
      %v247 = vpop.xlane.xlu0 %246
      %v248 = vsub.f32 %v240, %v247
      %v249 = vmul.f32 %v248, 1.442695
      %v250 = vpow.pop %v249
      %v251 = vsel %vm198, %v250, 0.0
      %252 = vadd.xlane.f32.xlu0 %v251
      %v253 = vpop.xlane.xlu0 %252
      %v254 = vpack.c.bf16 %v250, %v250
      %255 = vrot.lane.b32.xlu0 %v195, 64
      %v256 = vpop.permute.xlu0 %255
      %v258 = vsel %vm198, %v254, 0
      %vm260 = vcmask 1043456
      %v262 = vsel %vm260, %v256, 0
      %264 = vmatprep.subr.bf16.mxu0 0
      %265 = vmatpush1.bf16.msra.mxu0 %v262
      %266 = vmatprep.subr.bf16.mxu0 0
      %267 = vmatpush1.bf16.msra.mxu0 0
      %268 = vmatprep.subr.bf16.mxu0 0
      %269 = vmatpush1.bf16.msra.mxu0 0
      %270 = vmatprep.subr.bf16.mxu0 0
      %271 = vmatpush1.bf16.msra.mxu0 0
      %272 = vmatprep.subr.bf16.mxu0 0
      %273 = vmatpush1.bf16.msra.mxu0 0
      %274 = vmatprep.subr.bf16.mxu0 0
      %275 = vmatpush1.bf16.msra.mxu0 0
      %276 = vmatprep.subr.bf16.mxu0 0
      %277 = vmatpush1.bf16.msra.mxu0 0
      %278 = vmatprep.subr.bf16.mxu0 0
      %279 = vmatpush1.bf16.msra.mxu0 0
      %280 = vmatprep.subr.bf16.mxu0 0
      %281 = vmatpush1.bf16.msra.mxu0 0
      %282 = vmatprep.subr.bf16.mxu0 0
      %283 = vmatpush1.bf16.msra.mxu0 0
      %284 = vmatprep.subr.bf16.mxu0 0
      %285 = vmatpush1.bf16.msra.mxu0 0
      %286 = vmatprep.subr.bf16.mxu0 0
      %287 = vmatpush1.bf16.msra.mxu0 0
      %288 = vmatprep.subr.bf16.mxu0 0
      %289 = vmatpush1.bf16.msra.mxu0 0
      %290 = vmatprep.subr.bf16.mxu0 0
      %291 = vmatpush1.bf16.msra.mxu0 0
      %292 = vmatprep.subr.bf16.mxu0 0
      %293 = vmatpush1.bf16.msra.mxu0 0
      %294 = vmatprep.subr.bf16.mxu0 0
      %295 = vmatpush1.bf16.msra.mxu0 0
      %296 = vmatprep.mubr.bf16.mxu0 0
      %297 = vmatmul.mubr.bf16.gmra.mrb[0].mxu0 %v258
      %v298 = vpop.f32.mrb[0].mxu0
      %v299 = vadd.f32 0.0, %v298
      %v300 = vpop.f32.mrb[0].mxu0
      %v301 = vpop.f32.mrb[0].mxu0
      %v302 = vpop.f32.mrb[0].mxu0
      %303 = vdwg.mxu0
      %v304 = vrcp.pop %v253
      %v305 = vmul.f32 %v299, %v304
      %306 = vrot.lane.b32.xlu0 %v195, 120
      %v307 = vpop.permute.xlu0 %306
      %308 = vrot.lane.b32.xlu0 %v195, 88
      %v309 = vpop.permute.xlu0 %308
      %v311 = vsel %vm198, %v307, 0
      %v314 = vsel %vm198, %v309, 0
      %316 = vmatprep.subr.bf16.mxu0 0
      %317 = vmatpush1.bf16.xpose.msra.mxu0 %v314
      %318 = vmatprep.subr.bf16.mxu0 0
      %319 = vmatpush1.bf16.xpose.msra.mxu0 0
      %320 = vmatprep.subr.bf16.mxu0 0
      %321 = vmatpush1.bf16.xpose.msra.mxu0 0
      %322 = vmatprep.subr.bf16.mxu0 0
      %323 = vmatpush1.bf16.xpose.msra.mxu0 0
      %324 = vmatprep.subr.bf16.mxu0 0
      %325 = vmatpush1.bf16.xpose.msra.mxu0 0
      %326 = vmatprep.subr.bf16.mxu0 0
      %327 = vmatpush1.bf16.xpose.msra.mxu0 0
      %328 = vmatprep.subr.bf16.mxu0 0
      %329 = vmatpush1.bf16.xpose.msra.mxu0 0
      %330 = vmatprep.subr.bf16.mxu0 0
      %331 = vmatpush1.bf16.xpose.msra.mxu0 0
      %332 = vmatprep.subr.bf16.mxu0 0
      %333 = vmatpush1.bf16.xpose.msra.mxu0 0
      %334 = vmatprep.subr.bf16.mxu0 0
      %335 = vmatpush1.bf16.xpose.msra.mxu0 0
      %336 = vmatprep.subr.bf16.mxu0 0
      %337 = vmatpush1.bf16.xpose.msra.mxu0 0
      %338 = vmatprep.subr.bf16.mxu0 0
      %339 = vmatpush1.bf16.xpose.msra.mxu0 0
      %340 = vmatprep.subr.bf16.mxu0 0
      %341 = vmatpush1.bf16.xpose.msra.mxu0 0
      %342 = vmatprep.subr.bf16.mxu0 0
      %343 = vmatpush1.bf16.xpose.msra.mxu0 0
      %344 = vmatprep.subr.bf16.mxu0 0
      %345 = vmatpush1.bf16.xpose.msra.mxu0 0
      %346 = vmatprep.subr.bf16.mxu0 0
      %347 = vmatpush1.bf16.xpose.msra.mxu0 0
      %348 = vmatprep.mubr.bf16.mxu0 0
      %349 = vmatmul.mubr.bf16.gmra.mrb[0].mxu0 %v311
      %v350 = vpop.f32.mrb[0].mxu0
      %v351 = vadd.f32 %v191, %v350
      %v352 = vpop.f32.mrb[0].mxu0
      %v353 = vpop.f32.mrb[0].mxu0
      %v354 = vpop.f32.mrb[0].mxu0
      %355 = vdwg.mxu0
      %v356 = vsel %vm198, %v351, -inf
      %357 = vmax.xlane.f32.xlu0 %v356
      %v358 = vpop.xlane.xlu0 %357
      %v359 = vsub.f32 %v351, %v358
      %v360 = vmul.f32 %v359, 1.442695
      %v361 = vpow.pop %v360
      %v362 = vsel %vm198, %v361, 0.0
      %363 = vadd.xlane.f32.xlu0 %v362
      %v364 = vpop.xlane.xlu0 %363
      %v365 = vpack.c.bf16 %v361, %v361
      %366 = vrot.lane.b32.xlu0 %v195, 56
      %v367 = vpop.permute.xlu0 %366
      %v369 = vsel %vm198, %v365, 0
      %v372 = vsel %vm260, %v367, 0
      %374 = vmatprep.subr.bf16.mxu0 0
      %375 = vmatpush1.bf16.msra.mxu0 %v372
      %376 = vmatprep.subr.bf16.mxu0 0
      %377 = vmatpush1.bf16.msra.mxu0 0
      %378 = vmatprep.subr.bf16.mxu0 0
      %379 = vmatpush1.bf16.msra.mxu0 0
      %380 = vmatprep.subr.bf16.mxu0 0
      %381 = vmatpush1.bf16.msra.mxu0 0
      %382 = vmatprep.subr.bf16.mxu0 0
      %383 = vmatpush1.bf16.msra.mxu0 0
      %384 = vmatprep.subr.bf16.mxu0 0
      %385 = vmatpush1.bf16.msra.mxu0 0
      %386 = vmatprep.subr.bf16.mxu0 0
      %387 = vmatpush1.bf16.msra.mxu0 0
      %388 = vmatprep.subr.bf16.mxu0 0
      %389 = vmatpush1.bf16.msra.mxu0 0
      %390 = vmatprep.subr.bf16.mxu0 0
      %391 = vmatpush1.bf16.msra.mxu0 0
      %392 = vmatprep.subr.bf16.mxu0 0
      %393 = vmatpush1.bf16.msra.mxu0 0
      %394 = vmatprep.subr.bf16.mxu0 0
      %395 = vmatpush1.bf16.msra.mxu0 0
      %396 = vmatprep.subr.bf16.mxu0 0
      %397 = vmatpush1.bf16.msra.mxu0 0
      %398 = vmatprep.subr.bf16.mxu0 0
      %399 = vmatpush1.bf16.msra.mxu0 0
      %400 = vmatprep.subr.bf16.mxu0 0
      %401 = vmatpush1.bf16.msra.mxu0 0
      %402 = vmatprep.subr.bf16.mxu0 0
      %403 = vmatpush1.bf16.msra.mxu0 0
      %404 = vmatprep.subr.bf16.mxu0 0
      %405 = vmatpush1.bf16.msra.mxu0 0
      %406 = vmatprep.mubr.bf16.mxu0 0
      %407 = vmatmul.mubr.bf16.gmra.mrb[0].mxu0 %v369
      %v408 = vpop.f32.mrb[0].mxu0
      %v409 = vadd.f32 0.0, %v408
      %v410 = vpop.f32.mrb[0].mxu0
      %v411 = vpop.f32.mrb[0].mxu0
      %v412 = vpop.f32.mrb[0].mxu0
      %413 = vdwg.mxu0
      %v414 = vrcp.pop %v364
      %v415 = vmul.f32 %v409, %v414
      %416 = vrot.lane.b32.xlu0 %v195, 112
      %v417 = vpop.permute.xlu0 %416
      %418 = vrot.lane.b32.xlu0 %v195, 80
      %v419 = vpop.permute.xlu0 %418
      %v421 = vsel %vm198, %v417, 0
      %v424 = vsel %vm198, %v419, 0
      %426 = vmatprep.subr.bf16.mxu0 0
      %427 = vmatpush1.bf16.xpose.msra.mxu0 %v424
      %428 = vmatprep.subr.bf16.mxu0 0
      %429 = vmatpush1.bf16.xpose.msra.mxu0 0
      %430 = vmatprep.subr.bf16.mxu0 0
      %431 = vmatpush1.bf16.xpose.msra.mxu0 0
      %432 = vmatprep.subr.bf16.mxu0 0
      %433 = vmatpush1.bf16.xpose.msra.mxu0 0
      %434 = vmatprep.subr.bf16.mxu0 0
      %435 = vmatpush1.bf16.xpose.msra.mxu0 0
      %436 = vmatprep.subr.bf16.mxu0 0
      %437 = vmatpush1.bf16.xpose.msra.mxu0 0
      %438 = vmatprep.subr.bf16.mxu0 0
      %439 = vmatpush1.bf16.xpose.msra.mxu0 0
      %440 = vmatprep.subr.bf16.mxu0 0
      %441 = vmatpush1.bf16.xpose.msra.mxu0 0
      %442 = vmatprep.subr.bf16.mxu0 0
      %443 = vmatpush1.bf16.xpose.msra.mxu0 0
      %444 = vmatprep.subr.bf16.mxu0 0
      %445 = vmatpush1.bf16.xpose.msra.mxu0 0
      %446 = vmatprep.subr.bf16.mxu0 0
      %447 = vmatpush1.bf16.xpose.msra.mxu0 0
      %448 = vmatprep.subr.bf16.mxu0 0
      %449 = vmatpush1.bf16.xpose.msra.mxu0 0
      %450 = vmatprep.subr.bf16.mxu0 0
      %451 = vmatpush1.bf16.xpose.msra.mxu0 0
      %452 = vmatprep.subr.bf16.mxu0 0
      %453 = vmatpush1.bf16.xpose.msra.mxu0 0
      %454 = vmatprep.subr.bf16.mxu0 0
      %455 = vmatpush1.bf16.xpose.msra.mxu0 0
      %456 = vmatprep.subr.bf16.mxu0 0
      %457 = vmatpush1.bf16.xpose.msra.mxu0 0
      %458 = vmatprep.mubr.bf16.mxu0 0
      %459 = vmatmul.mubr.bf16.gmra.mrb[0].mxu0 %v421
      %v460 = vpop.f32.mrb[0].mxu0
      %v461 = vadd.f32 %v191, %v460
      %v462 = vpop.f32.mrb[0].mxu0
      %v463 = vpop.f32.mrb[0].mxu0
      %v464 = vpop.f32.mrb[0].mxu0
      %465 = vdwg.mxu0
      %v466 = vsel %vm198, %v461, -inf
      %467 = vmax.xlane.f32.xlu0 %v466
      %v468 = vpop.xlane.xlu0 %467
      %v469 = vsub.f32 %v461, %v468
      %v470 = vmul.f32 %v469, 1.442695
      %v471 = vpow.pop %v470
      %v472 = vsel %vm198, %v471, 0.0
      %473 = vadd.xlane.f32.xlu0 %v472
      %v474 = vpop.xlane.xlu0 %473
      %v475 = vpack.c.bf16 %v471, %v471
      %476 = vrot.lane.b32.xlu0 %v195, 48
      %v477 = vpop.permute.xlu0 %476
      %v479 = vsel %vm198, %v475, 0
      %v482 = vsel %vm260, %v477, 0
      %484 = vmatprep.subr.bf16.mxu0 0
      %485 = vmatpush1.bf16.msra.mxu0 %v482
      %486 = vmatprep.subr.bf16.mxu0 0
      %487 = vmatpush1.bf16.msra.mxu0 0
      %488 = vmatprep.subr.bf16.mxu0 0
      %489 = vmatpush1.bf16.msra.mxu0 0
      %490 = vmatprep.subr.bf16.mxu0 0
      %491 = vmatpush1.bf16.msra.mxu0 0
      %492 = vmatprep.subr.bf16.mxu0 0
      %493 = vmatpush1.bf16.msra.mxu0 0
      %494 = vmatprep.subr.bf16.mxu0 0
      %495 = vmatpush1.bf16.msra.mxu0 0
      %496 = vmatprep.subr.bf16.mxu0 0
      %497 = vmatpush1.bf16.msra.mxu0 0
      %498 = vmatprep.subr.bf16.mxu0 0
      %499 = vmatpush1.bf16.msra.mxu0 0
      %500 = vmatprep.subr.bf16.mxu0 0
      %501 = vmatpush1.bf16.msra.mxu0 0
      %502 = vmatprep.subr.bf16.mxu0 0
      %503 = vmatpush1.bf16.msra.mxu0 0
      %504 = vmatprep.subr.bf16.mxu0 0
      %505 = vmatpush1.bf16.msra.mxu0 0
      %506 = vmatprep.subr.bf16.mxu0 0
      %507 = vmatpush1.bf16.msra.mxu0 0
      %508 = vmatprep.subr.bf16.mxu0 0
      %509 = vmatpush1.bf16.msra.mxu0 0
      %510 = vmatprep.subr.bf16.mxu0 0
      %511 = vmatpush1.bf16.msra.mxu0 0
      %512 = vmatprep.subr.bf16.mxu0 0
      %513 = vmatpush1.bf16.msra.mxu0 0
      %514 = vmatprep.subr.bf16.mxu0 0
      %515 = vmatpush1.bf16.msra.mxu0 0
      %516 = vmatprep.mubr.bf16.mxu0 0
      %517 = vmatmul.mubr.bf16.gmra.mrb[0].mxu0 %v479
      %v518 = vpop.f32.mrb[0].mxu0
      %v519 = vadd.f32 0.0, %v518
      %v520 = vpop.f32.mrb[0].mxu0
      %v521 = vpop.f32.mrb[0].mxu0
      %v522 = vpop.f32.mrb[0].mxu0
      %523 = vdwg.mxu0
      %v524 = vrcp.pop %v474
      %v525 = vmul.f32 %v519, %v524
      %526 = vrot.lane.b32.xlu0 %v195, 104
      %v527 = vpop.permute.xlu0 %526
      %528 = vrot.lane.b32.xlu0 %v195, 72
      %v529 = vpop.permute.xlu0 %528
      %v531 = vsel %vm198, %v527, 0
      %v534 = vsel %vm198, %v529, 0
      %536 = vmatprep.subr.bf16.mxu0 0
      %537 = vmatpush1.bf16.xpose.msra.mxu0 %v534
      %538 = vmatprep.subr.bf16.mxu0 0
      %539 = vmatpush1.bf16.xpose.msra.mxu0 0
      %540 = vmatprep.subr.bf16.mxu0 0
      %541 = vmatpush1.bf16.xpose.msra.mxu0 0
      %542 = vmatprep.subr.bf16.mxu0 0
      %543 = vmatpush1.bf16.xpose.msra.mxu0 0
      %544 = vmatprep.subr.bf16.mxu0 0
      %545 = vmatpush1.bf16.xpose.msra.mxu0 0
      %546 = vmatprep.subr.bf16.mxu0 0
      %547 = vmatpush1.bf16.xpose.msra.mxu0 0
      %548 = vmatprep.subr.bf16.mxu0 0
      %549 = vmatpush1.bf16.xpose.msra.mxu0 0
      %550 = vmatprep.subr.bf16.mxu0 0
      %551 = vmatpush1.bf16.xpose.msra.mxu0 0
      %552 = vmatprep.subr.bf16.mxu0 0
      %553 = vmatpush1.bf16.xpose.msra.mxu0 0
      %554 = vmatprep.subr.bf16.mxu0 0
      %555 = vmatpush1.bf16.xpose.msra.mxu0 0
      %556 = vmatprep.subr.bf16.mxu0 0
      %557 = vmatpush1.bf16.xpose.msra.mxu0 0
      %558 = vmatprep.subr.bf16.mxu0 0
      %559 = vmatpush1.bf16.xpose.msra.mxu0 0
      %560 = vmatprep.subr.bf16.mxu0 0
      %561 = vmatpush1.bf16.xpose.msra.mxu0 0
      %562 = vmatprep.subr.bf16.mxu0 0
      %563 = vmatpush1.bf16.xpose.msra.mxu0 0
      %564 = vmatprep.subr.bf16.mxu0 0
      %565 = vmatpush1.bf16.xpose.msra.mxu0 0
      %566 = vmatprep.subr.bf16.mxu0 0
      %567 = vmatpush1.bf16.xpose.msra.mxu0 0
      %568 = vmatprep.mubr.bf16.mxu0 0
      %569 = vmatmul.mubr.bf16.gmra.mrb[0].mxu0 %v531
      %v570 = vpop.f32.mrb[0].mxu0
      %v571 = vadd.f32 %v191, %v570
      %v572 = vpop.f32.mrb[0].mxu0
      %v573 = vpop.f32.mrb[0].mxu0
      %v574 = vpop.f32.mrb[0].mxu0
      %575 = vdwg.mxu0
      %v576 = vsel %vm198, %v571, -inf
      %577 = vmax.xlane.f32.xlu0 %v576
      %v578 = vpop.xlane.xlu0 %577
      %v579 = vsub.f32 %v571, %v578
      %v580 = vmul.f32 %v579, 1.442695
      %v581 = vpow.pop %v580
      %v582 = vsel %vm198, %v581, 0.0
      %583 = vadd.xlane.f32.xlu0 %v582
      %v584 = vpop.xlane.xlu0 %583
      %v585 = vpack.c.bf16 %v581, %v581
      %586 = vrot.lane.b32.xlu0 %v195, 40
      %v587 = vpop.permute.xlu0 %586
      %v589 = vsel %vm198, %v585, 0
      %v592 = vsel %vm260, %v587, 0
      %594 = vmatprep.subr.bf16.mxu0 0
      %595 = vmatpush1.bf16.msra.mxu0 %v592
      %596 = vmatprep.subr.bf16.mxu0 0
      %597 = vmatpush1.bf16.msra.mxu0 0
      %598 = vmatprep.subr.bf16.mxu0 0
      %599 = vmatpush1.bf16.msra.mxu0 0
      %600 = vmatprep.subr.bf16.mxu0 0
      %601 = vmatpush1.bf16.msra.mxu0 0
      %602 = vmatprep.subr.bf16.mxu0 0
      %603 = vmatpush1.bf16.msra.mxu0 0
      %604 = vmatprep.subr.bf16.mxu0 0
      %605 = vmatpush1.bf16.msra.mxu0 0
      %606 = vmatprep.subr.bf16.mxu0 0
      %607 = vmatpush1.bf16.msra.mxu0 0
      %608 = vmatprep.subr.bf16.mxu0 0
      %609 = vmatpush1.bf16.msra.mxu0 0
      %610 = vmatprep.subr.bf16.mxu0 0
      %611 = vmatpush1.bf16.msra.mxu0 0
      %612 = vmatprep.subr.bf16.mxu0 0
      %613 = vmatpush1.bf16.msra.mxu0 0
      %614 = vmatprep.subr.bf16.mxu0 0
      %615 = vmatpush1.bf16.msra.mxu0 0
      %616 = vmatprep.subr.bf16.mxu0 0
      %617 = vmatpush1.bf16.msra.mxu0 0
      %618 = vmatprep.subr.bf16.mxu0 0
      %619 = vmatpush1.bf16.msra.mxu0 0
      %620 = vmatprep.subr.bf16.mxu0 0
      %621 = vmatpush1.bf16.msra.mxu0 0
      %622 = vmatprep.subr.bf16.mxu0 0
      %623 = vmatpush1.bf16.msra.mxu0 0
      %624 = vmatprep.subr.bf16.mxu0 0
      %625 = vmatpush1.bf16.msra.mxu0 0
      %626 = vmatprep.mubr.bf16.mxu0 0
      %627 = vmatmul.mubr.bf16.gmra.mrb[0].mxu0 %v589
      %v628 = vpop.f32.mrb[0].mxu0
      %v629 = vadd.f32 0.0, %v628
      %v630 = vpop.f32.mrb[0].mxu0
      %v631 = vpop.f32.mrb[0].mxu0
      %v632 = vpop.f32.mrb[0].mxu0
      %633 = vdwg.mxu0
      %v634 = vrcp.pop %v584
      %v635 = vmul.f32 %v629, %v634
      %637 = vrot.lane.b32.xlu0 %v415, 8
      %v638 = vpop.permute.xlu0 %637
      %641 = vrot.lane.b32.xlu0 %v525, 16
      %v642 = vpop.permute.xlu0 %641
      %645 = vrot.lane.b32.xlu0 %v635, 24
      %v646 = vpop.permute.xlu0 %645
      %v648 = vsel %vm198, %v305, %v638
      %vm649 = vcmask 130048
      %v650 = vsel %vm649, %v648, %v642
      %vm651 = vcmask 195584
      %v652 = vsel %vm651, %v650, %v646
      %v653 = vpack.c.bf16 %v652, %v652
      %vm654 = vcmask 257024
      %655 = vst.msk [vmem:[%s183] sm:$0xf] %vm654, %v653
      %p656 = scmp.lt.s32.totalorder %s17, 1
      %s657 = scalar_select %p656, %s17, 1
      %p658 = scmp.lt.s32.totalorder %s18, 0
      %s659 = scalar_select %p658, %s18, 0
      %s660 = sadd.s32 %s659, %s657
      %s661 = smul.addr %s660, 4
      %s662 = scalar_lea.vmem %s2, %s661
      // Predicated region
      $region29: #{sa_linear_model_forward.14} parent=27 // pred_check
        %p663 = pneg %p99
      $region30: #{sa_linear_model_forward.14} parent=27 // pred_check_branch
        %665 = sbr.rel (%p663) target = $region32
      $region31: #{sa_linear_model_forward.14} parent=27 // pred_region
        _
      $region32: #{sa_linear_model_forward.14} parent=27 // pred_fallthru
        _
    $region28: #{sa_linear_model_forward.14} parent=5 // pred_fallthru
      _
    %p666 = scmp.le.s32.totalorder 2, %s8
    // Predicated region
    $region33: #{sa_linear_model_forward.14} parent=5 // pred_check
      %p667 = pneg %p666
    $region34: #{sa_linear_model_forward.14} parent=5 // pred_check_branch
      %669 = sbr.rel (%p667) target = $region36
    $region35: #{sa_linear_model_forward.14} parent=5 // pred_region
      %s670 = ssub.s32 %s8, 2
      // Predicated region
      $region37: #{sa_linear_model_forward.14} parent=35 // pred_check
        %p671 = pneg %p105
      $region38: #{sa_linear_model_forward.14} parent=35 // pred_check_branch
        %673 = sbr.rel (%p671) target = $region40
      $region39: #{sa_linear_model_forward.14} parent=35 // pred_region
        %p674 = scmp.lt.s32.totalorder %s19, 1
        %s675 = scalar_select %p674, %s19, 1
        %p676 = scmp.lt.s32.totalorder %s20, 0
        %s677 = scalar_select %p676, %s20, 0
        %s678 = sadd.s32 %s677, %s675
        %s679 = smul.addr %s678, 4
        %s680 = scalar_lea.vmem %s2, %s679
      $region40: #{sa_linear_model_forward.14} parent=35 // pred_fallthru
        _
    $region36: #{sa_linear_model_forward.14} parent=5 // pred_fallthru
      _
  $region6: #{sa_linear_model_forward.14} parent=0 // loop_footer
    %s12 = sadd.s32 1, %s8
  $region7: #{sa_linear_model_forward.14} parent=0 // loop_footer_branch
    %7 = sbr.rel target = $region3
  $region8: #{sa_linear_model_forward.14} parent=0 // loop_exit
    _

// kernel: sa_linear_model_forward.16
$region0: #{sa_linear_model_forward.16}
  #allocation0 [shape = 'u32[]', space=smem, size = 0x4, offset = 0x4, fixed_abs, tag = 'smem constant byte address 0x4 - core index']
  #allocation1 [shape = 'u32[144,128]{1,0:T(1,128)}', space=vmem, size = 0x12000, scoped, tag = 'internal scratch']
  %s0 = inlined_call_operand.vmem [shape: bf16[16,32], index: 0, kind: input, shape index: {}]
  %s1 = inlined_call_operand.vmem [shape: bf16[32,64], index: 1, kind: input, shape index: {}]
  %s2 = inlined_call_operand.vmem [shape: f32[1,64], index: 2, kind: input, shape index: {}]
  %s3 = inlined_call_operand.vmem [shape: bf16[16,64], index: 3, kind: output, shape index: {}]
  %s4 = sld [smem:[#allocation0]]
  $region22: #{sa_linear_model_forward.16} parent=0
    _
  %s6 = ssub.s32 1, %s4
  %s7 = scalar_select 0, %s6, %s4
  // Predicated region
  $region2: #{sa_linear_model_forward.16} parent=0 // pred_check
    _
  $region3: #{sa_linear_model_forward.16} parent=0 // pred_check_branch
    %9 = sbr.rel (0) target = $region5
  $region4: #{sa_linear_model_forward.16} parent=0 // pred_region
    _
  $region5: #{sa_linear_model_forward.16} parent=0 // pred_fallthru
    _
  // Predicated region
  $region6: #{sa_linear_model_forward.16} parent=0 // pred_check
    _
  $region7: #{sa_linear_model_forward.16} parent=0 // pred_check_branch
    %11 = sbr.rel (0) target = $region9
  $region8: #{sa_linear_model_forward.16} parent=0 // pred_region
    _
  $region9: #{sa_linear_model_forward.16} parent=0 // pred_fallthru
    _
  // Predicated region
  $region10: #{sa_linear_model_forward.16} parent=0 // pred_check
    _
  $region11: #{sa_linear_model_forward.16} parent=0 // pred_check_branch
    %13 = sbr.rel (0) target = $region13
  $region12: #{sa_linear_model_forward.16} parent=0 // pred_region
    _
  $region13: #{sa_linear_model_forward.16} parent=0 // pred_fallthru
    _
  %v15 = vld [vmem:[%s0] sm:$0xf]
  %v16 = vld [vmem:[%s0 + $0x4] sm:$0xf]
  %v17 = vld [vmem:[%s1] sm:$0xf]
  %v18 = vld [vmem:[%s1 + $0x4] sm:$0xf]
  %v19 = vld [vmem:[%s1 + $0x8] sm:$0xf]
  %v20 = vld [vmem:[%s1 + $0xc] sm:$0xf]
  %v21 = vld [vmem:[%s2] sm:$0x1]
  %v23 = vlaneseq
  %v24 = vshrl.u32 %v23, 7
  %v25 = vsub.s32 0, %v24
  %v26 = vrot.slane %v21, %v25
  %v30 = vunpack.c.l.b16 %v15
  %v31 = vunpack.c.l.b16 %v16
  %v32 = vpack.c.b16 %v31, %v30
  %v37 = vunpack.c.l.b16 %v17
  %v38 = vunpack.c.l.b16 %v18
  %v39 = vunpack.c.l.b16 %v19
  %v40 = vunpack.c.l.b16 %v20
  %v41 = vpack.c.b16 %v38, %v37
  %v42 = vpack.c.b16 %v40, %v39
  %vm45 = vcmask 261120
  %v47 = vsel %vm45, %v32, 0
  %49 = vmatprep.subr.bf16.mxu0 0
  %50 = vmatpush1.bf16.msra.mxu0 %v41
  %51 = vmatprep.subr.bf16.mxu0 0
  %52 = vmatpush1.bf16.msra.mxu0 %v42
  %53 = vmatprep.subr.bf16.mxu0 0
  %54 = vmatpush1.bf16.msra.mxu0 0
  %55 = vmatprep.subr.bf16.mxu0 0
  %56 = vmatpush1.bf16.msra.mxu0 0
  %57 = vmatprep.subr.bf16.mxu0 0
  %58 = vmatpush1.bf16.msra.mxu0 0
  %59 = vmatprep.subr.bf16.mxu0 0
  %60 = vmatpush1.bf16.msra.mxu0 0
  %61 = vmatprep.subr.bf16.mxu0 0
  %62 = vmatpush1.bf16.msra.mxu0 0
  %63 = vmatprep.subr.bf16.mxu0 0
  %64 = vmatpush1.bf16.msra.mxu0 0
  %65 = vmatprep.subr.bf16.mxu0 0
  %66 = vmatpush1.bf16.msra.mxu0 0
  %67 = vmatprep.subr.bf16.mxu0 0
  %68 = vmatpush1.bf16.msra.mxu0 0
  %69 = vmatprep.subr.bf16.mxu0 0
  %70 = vmatpush1.bf16.msra.mxu0 0
  %71 = vmatprep.subr.bf16.mxu0 0
  %72 = vmatpush1.bf16.msra.mxu0 0
  %73 = vmatprep.subr.bf16.mxu0 0
  %74 = vmatpush1.bf16.msra.mxu0 0
  %75 = vmatprep.subr.bf16.mxu0 0
  %76 = vmatpush1.bf16.msra.mxu0 0
  %77 = vmatprep.subr.bf16.mxu0 0
  %78 = vmatpush1.bf16.msra.mxu0 0
  %79 = vmatprep.subr.bf16.mxu0 0
  %80 = vmatpush1.bf16.msra.mxu0 0
  %81 = vmatprep.mubr.bf16.mxu0 0
  %82 = vmatmul.mubr.bf16.gmra.mrb[0].mxu0 %v47
  %v83 = vpop.f32.mrb[0].mxu0
  %v84 = vadd.f32 %v26, %v83
  %v85 = vpop.f32.mrb[0].mxu0
  %v86 = vpop.f32.mrb[0].mxu0
  %v87 = vadd.f32 %v26, %v86
  %v88 = vpop.f32.mrb[0].mxu0
  %89 = vdwg.mxu0
  %v90 = vmul.f32 %v84, %v84
  %v91 = vmul.f32 %v87, %v87
  %v92 = vmul.f32 %v84, 0.5
  %v93 = vmul.f32 %v87, 0.5
  %v94 = vmul.f32 %v90, 0.044715
  %v95 = vmul.f32 %v91, 0.044715
  %v96 = vmul.f32 %v94, %v84
  %v97 = vmul.f32 %v95, %v87
  %v98 = vadd.f32 %v84, %v96
  %v99 = vadd.f32 %v87, %v97
  %v100 = vmul.f32 %v98, 0.7978846
  %v101 = vmul.f32 %v99, 0.7978846
  %v102 = vtanh.pop %v100
  %v103 = vtanh.pop %v101
  %v104 = vadd.f32 %v102, 1.0
  %v105 = vadd.f32 %v103, 1.0
  %v106 = vmul.f32 %v92, %v104
  %v107 = vmul.f32 %v93, %v105
  %v108 = vpack.c.bf16 %v107, %v106
  %v110 = vunpack.c.l.b16 %v108
  %v111 = vunpack.c.h.b16 %v108
  %v112 = vpack.c.b16 %v110, %v110
  %v113 = vpack.c.b16 %v111, %v111
  %vm116 = vcmask 519168
  %117 = vst.msk [vmem:[%s3] sm:$0xf] %vm116, %v112
  %118 = vst.msk [vmem:[%s3 + $0x4] sm:$0xf] %vm116, %v113
  // Predicated region
  $region14: #{sa_linear_model_forward.16} parent=0 // pred_check
    _
  $region15: #{sa_linear_model_forward.16} parent=0 // pred_check_branch
    %120 = sbr.rel (0) target = $region17
  $region16: #{sa_linear_model_forward.16} parent=0 // pred_region
    _
  $region17: #{sa_linear_model_forward.16} parent=0 // pred_fallthru
    _
  // Predicated region
  $region18: #{sa_linear_model_forward.16} parent=0 // pred_check
    _
  $region19: #{sa_linear_model_forward.16} parent=0 // pred_check_branch
    %122 = sbr.rel (0) target = $region21
  $region20: #{sa_linear_model_forward.16} parent=0 // pred_region
    _
  $region21: #{sa_linear_model_forward.16} parent=0 // pred_fallthru
    _

// kernel: sa_linear_model_forward.23
$region0: #{sa_linear_model_forward.23}
  #allocation0 [shape = 'u32[]', space=smem, size = 0x4, offset = 0x4, fixed_abs, tag = 'smem constant byte address 0x4 - core index']
  #allocation1 [shape = 'u32[144,128]{1,0:T(1,128)}', space=vmem, size = 0x12000, scoped, tag = 'internal scratch']
  %s0 = inlined_call_operand.vmem [shape: bf16[2,32], index: 0, kind: input, shape index: {}]
  %s1 = inlined_call_operand.vmem [shape: bf16[32,128], index: 1, kind: input, shape index: {}]
  %s2 = inlined_call_operand.vmem [shape: f32[1,128], index: 2, kind: input, shape index: {}]
  %s3 = inlined_call_operand.hbm [shape: f32[2,128], index: 3, kind: output, shape index: {}]
  %s4 = sld [smem:[#allocation0]]
  $region22: #{sa_linear_model_forward.23} parent=0
    _
  %s6 = ssub.s32 1, %s4
  %s7 = scalar_select 0, %s6, %s4
  $region1: #{sa_linear_model_forward.23} parent=0
    #allocation2 [shape = 'u8[1024]{0}', space=vmem, size = 0x400, scoped, tag = 'output window, operand 0, single buffered']
    #allocation3 [shape = 's32[1]{0}', space=sflag, size = 0x4, scoped, tag = 'scoped memory for sa_linear_model_forward.23']
    %8 = vsyncpa [#allocation3], 0
    // Predicated region
    $region2: #{sa_linear_model_forward.23} parent=1 // pred_check
      _
    $region3: #{sa_linear_model_forward.23} parent=1 // pred_check_branch
      %10 = sbr.rel (0) target = $region5
    $region4: #{sa_linear_model_forward.23} parent=1 // pred_region
      _
    $region5: #{sa_linear_model_forward.23} parent=1 // pred_fallthru
      _
    // Predicated region
    $region6: #{sa_linear_model_forward.23} parent=1 // pred_check
      _
    $region7: #{sa_linear_model_forward.23} parent=1 // pred_check_branch
      %12 = sbr.rel (0) target = $region9
    $region8: #{sa_linear_model_forward.23} parent=1 // pred_region
      _
    $region9: #{sa_linear_model_forward.23} parent=1 // pred_fallthru
      _
    // Predicated region
    $region10: #{sa_linear_model_forward.23} parent=1 // pred_check
      _
    $region11: #{sa_linear_model_forward.23} parent=1 // pred_check_branch
      %14 = sbr.rel (0) target = $region13
    $region12: #{sa_linear_model_forward.23} parent=1 // pred_region
      _
    $region13: #{sa_linear_model_forward.23} parent=1 // pred_fallthru
      _
    %v16 = vld [vmem:[%s0] sm:$0x1]
    %v17 = vld [vmem:[%s1] sm:$0xf]
    %v18 = vld [vmem:[%s1 + $0x4] sm:$0xf]
    %v19 = vld [vmem:[%s1 + $0x8] sm:$0xf]
    %v20 = vld [vmem:[%s1 + $0xc] sm:$0xf]
    %v21 = vld [vmem:[%s2] sm:$0x1]
    %v23 = vlaneseq
    %v24 = vshrl.u32 %v23, 7
    %v25 = vsub.s32 0, %v24
    %v26 = vrot.slane %v21, %v25
    %v32 = vunpack.c.l.b16 %v17
    %v33 = vunpack.c.l.b16 %v18
    %v34 = vunpack.c.l.b16 %v19
    %v35 = vunpack.c.l.b16 %v20
    %v36 = vpack.c.b16 %v33, %v32
    %v37 = vpack.c.b16 %v35, %v34
    %vm40 = vcmask 261120
    %v42 = vsel %vm40, %v16, 0
    %44 = vmatprep.subr.bf16.mxu0 0
    %45 = vmatpush1.bf16.msra.mxu0 %v36
    %46 = vmatprep.subr.bf16.mxu0 0
    %47 = vmatpush1.bf16.msra.mxu0 %v37
    %48 = vmatprep.subr.bf16.mxu0 0
    %49 = vmatpush1.bf16.msra.mxu0 0
    %50 = vmatprep.subr.bf16.mxu0 0
    %51 = vmatpush1.bf16.msra.mxu0 0
    %52 = vmatprep.subr.bf16.mxu0 0
    %53 = vmatpush1.bf16.msra.mxu0 0
    %54 = vmatprep.subr.bf16.mxu0 0
    %55 = vmatpush1.bf16.msra.mxu0 0
    %56 = vmatprep.subr.bf16.mxu0 0
    %57 = vmatpush1.bf16.msra.mxu0 0
    %58 = vmatprep.subr.bf16.mxu0 0
    %59 = vmatpush1.bf16.msra.mxu0 0
    %60 = vmatprep.subr.bf16.mxu0 0
    %61 = vmatpush1.bf16.msra.mxu0 0
    %62 = vmatprep.subr.bf16.mxu0 0
    %63 = vmatpush1.bf16.msra.mxu0 0
    %64 = vmatprep.subr.bf16.mxu0 0
    %65 = vmatpush1.bf16.msra.mxu0 0
    %66 = vmatprep.subr.bf16.mxu0 0
    %67 = vmatpush1.bf16.msra.mxu0 0
    %68 = vmatprep.subr.bf16.mxu0 0
    %69 = vmatpush1.bf16.msra.mxu0 0
    %70 = vmatprep.subr.bf16.mxu0 0
    %71 = vmatpush1.bf16.msra.mxu0 0
    %72 = vmatprep.subr.bf16.mxu0 0
    %73 = vmatpush1.bf16.msra.mxu0 0
    %74 = vmatprep.subr.bf16.mxu0 0
    %75 = vmatpush1.bf16.msra.mxu0 0
    %76 = vmatprep.mubr.bf16.mxu0 0
    %77 = vmatmul.mubr.bf16.gmra.mrb[0].mxu0 %v42
    %v78 = vpop.f32.mrb[0].mxu0
    %v79 = vadd.f32 %v26, %v78
    %v80 = vpop.f32.mrb[0].mxu0
    %v81 = vpop.f32.mrb[0].mxu0
    %v82 = vpop.f32.mrb[0].mxu0
    %83 = vdwg.mxu0
    %84 = vst [vmem:[#allocation2] sm:$0x3] %v79
    // Predicated region
    $region14: #{sa_linear_model_forward.23} parent=1 // pred_check
      _
    $region15: #{sa_linear_model_forward.23} parent=1 // pred_check_branch
      %86 = sbr.rel (0) target = $region17
    $region16: #{sa_linear_model_forward.23} parent=1 // pred_region
      %s88 = ssub.s32 32, 32
      %89 = vsyncadd [#allocation3], %s88
      %s91 = sshll.u32 [#allocation2], 4
      %s92 = int_to_ptr.vmem [resolvable:$true] %s91
      %94 = dma.vmem_to_hbm [thread:$0]  %s92, 32, %s3, [#allocation3]
    $region17: #{sa_linear_model_forward.23} parent=1 // pred_fallthru
      _
    // Predicated region
    $region18: #{sa_linear_model_forward.23} parent=1 // pred_check
      _
    $region19: #{sa_linear_model_forward.23} parent=1 // pred_check_branch
      %96 = sbr.rel (0) target = $region21
    $region20: #{sa_linear_model_forward.23} parent=1 // pred_region
      %97 = dma.done [#allocation3], 32
    $region21: #{sa_linear_model_forward.23} parent=1 // pred_fallthru
      _
    %98 = vsyncpa [#allocation3], 1

// kernel: sa_linear_model_forward.17
$region0: #{sa_linear_model_forward.17}
  #allocation0 [shape = 'u32[]', space=smem, size = 0x4, offset = 0x4, fixed_abs, tag = 'smem constant byte address 0x4 - core index']
  #allocation1 [shape = 'u32[144,128]{1,0:T(1,128)}', space=vmem, size = 0x12000, scoped, tag = 'internal scratch']
  %s0 = inlined_call_operand.vmem [shape: bf16[16,64], index: 0, kind: input, shape index: {}]
  %s1 = inlined_call_operand.vmem [shape: bf16[64,32], index: 1, kind: input, shape index: {}]
  %s2 = inlined_call_operand.vmem [shape: f32[1,32], index: 2, kind: input, shape index: {}]
  %s3 = inlined_call_operand.vmem [shape: bf16[16,32], index: 3, kind: input, shape index: {}]
  %s4 = inlined_call_operand.vmem [shape: f32[1,32], index: 4, kind: input, shape index: {}]
  %s5 = inlined_call_operand.vmem [shape: f32[1,32], index: 5, kind: input, shape index: {}]
  %s6 = inlined_call_operand.vmem [shape: bf16[16,32], index: 6, kind: output, shape index: {}]
  %s7 = sld [smem:[#allocation0]]
  $region34: #{sa_linear_model_forward.17} parent=0
    _
  %s9 = ssub.s32 1, %s7
  %s10 = scalar_select 0, %s9, %s7
  // Predicated region
  $region2: #{sa_linear_model_forward.17} parent=0 // pred_check
    _
  $region3: #{sa_linear_model_forward.17} parent=0 // pred_check_branch
    %12 = sbr.rel (0) target = $region5
  $region4: #{sa_linear_model_forward.17} parent=0 // pred_region
    _
  $region5: #{sa_linear_model_forward.17} parent=0 // pred_fallthru
    _
  // Predicated region
  $region6: #{sa_linear_model_forward.17} parent=0 // pred_check
    _
  $region7: #{sa_linear_model_forward.17} parent=0 // pred_check_branch
    %14 = sbr.rel (0) target = $region9
  $region8: #{sa_linear_model_forward.17} parent=0 // pred_region
    _
  $region9: #{sa_linear_model_forward.17} parent=0 // pred_fallthru
    _
  // Predicated region
  $region10: #{sa_linear_model_forward.17} parent=0 // pred_check
    _
  $region11: #{sa_linear_model_forward.17} parent=0 // pred_check_branch
    %16 = sbr.rel (0) target = $region13
  $region12: #{sa_linear_model_forward.17} parent=0 // pred_region
    _
  $region13: #{sa_linear_model_forward.17} parent=0 // pred_fallthru
    _
  // Predicated region
  $region14: #{sa_linear_model_forward.17} parent=0 // pred_check
    _
  $region15: #{sa_linear_model_forward.17} parent=0 // pred_check_branch
    %18 = sbr.rel (0) target = $region17
  $region16: #{sa_linear_model_forward.17} parent=0 // pred_region
    _
  $region17: #{sa_linear_model_forward.17} parent=0 // pred_fallthru
    _
  // Predicated region
  $region18: #{sa_linear_model_forward.17} parent=0 // pred_check
    _
  $region19: #{sa_linear_model_forward.17} parent=0 // pred_check_branch
    %20 = sbr.rel (0) target = $region21
  $region20: #{sa_linear_model_forward.17} parent=0 // pred_region
    _
  $region21: #{sa_linear_model_forward.17} parent=0 // pred_fallthru
    _
  // Predicated region
  $region22: #{sa_linear_model_forward.17} parent=0 // pred_check
    _
  $region23: #{sa_linear_model_forward.17} parent=0 // pred_check_branch
    %22 = sbr.rel (0) target = $region25
  $region24: #{sa_linear_model_forward.17} parent=0 // pred_region
    _
  $region25: #{sa_linear_model_forward.17} parent=0 // pred_fallthru
    _
  %v24 = vld [vmem:[%s0] sm:$0xf]
  %v25 = vld [vmem:[%s0 + $0x4] sm:$0xf]
  %v26 = vld [vmem:[%s1] sm:$0xf]
  %v27 = vld [vmem:[%s1 + $0x4] sm:$0xf]
  %v28 = vld [vmem:[%s1 + $0x8] sm:$0xf]
  %v29 = vld [vmem:[%s1 + $0xc] sm:$0xf]
  %v30 = vld [vmem:[%s1 + $0x10] sm:$0xf]
  %v31 = vld [vmem:[%s1 + $0x14] sm:$0xf]
  %v32 = vld [vmem:[%s1 + $0x18] sm:$0xf]
  %v33 = vld [vmem:[%s1 + $0x1c] sm:$0xf]
  %v34 = vld [vmem:[%s2] sm:$0x1]
  %v36 = vlaneseq
  %v37 = vshrl.u32 %v36, 7
  %v38 = vsub.s32 0, %v37
  %v39 = vrot.slane %v34, %v38
  %v43 = vunpack.c.l.b16 %v24
  %v44 = vunpack.c.l.b16 %v25
  %v45 = vpack.c.b16 %v44, %v43
  %v54 = vunpack.c.l.b16 %v26
  %v55 = vunpack.c.l.b16 %v27
  %v56 = vunpack.c.l.b16 %v28
  %v57 = vunpack.c.l.b16 %v29
  %v58 = vunpack.c.l.b16 %v30
  %v59 = vunpack.c.l.b16 %v31
  %v60 = vunpack.c.l.b16 %v32
  %v61 = vunpack.c.l.b16 %v33
  %v62 = vpack.c.b16 %v55, %v54
  %v63 = vpack.c.b16 %v57, %v56
  %v64 = vpack.c.b16 %v59, %v58
  %v65 = vpack.c.b16 %v61, %v60
  %vm70 = vcmask 523264
  %v72 = vsel %vm70, %v45, 0
  %74 = vmatprep.subr.bf16.mxu0 0
  %75 = vmatpush1.bf16.msra.mxu0 %v62
  %76 = vmatprep.subr.bf16.mxu0 0
  %77 = vmatpush1.bf16.msra.mxu0 %v63
  %78 = vmatprep.subr.bf16.mxu0 0
  %79 = vmatpush1.bf16.msra.mxu0 %v64
  %80 = vmatprep.subr.bf16.mxu0 0
  %81 = vmatpush1.bf16.msra.mxu0 %v65
  %82 = vmatprep.subr.bf16.mxu0 0
  %83 = vmatpush1.bf16.msra.mxu0 0
  %84 = vmatprep.subr.bf16.mxu0 0
  %85 = vmatpush1.bf16.msra.mxu0 0
  %86 = vmatprep.subr.bf16.mxu0 0
  %87 = vmatpush1.bf16.msra.mxu0 0
  %88 = vmatprep.subr.bf16.mxu0 0
  %89 = vmatpush1.bf16.msra.mxu0 0
  %90 = vmatprep.subr.bf16.mxu0 0
  %91 = vmatpush1.bf16.msra.mxu0 0
  %92 = vmatprep.subr.bf16.mxu0 0
  %93 = vmatpush1.bf16.msra.mxu0 0
  %94 = vmatprep.subr.bf16.mxu0 0
  %95 = vmatpush1.bf16.msra.mxu0 0
  %96 = vmatprep.subr.bf16.mxu0 0
  %97 = vmatpush1.bf16.msra.mxu0 0
  %98 = vmatprep.subr.bf16.mxu0 0
  %99 = vmatpush1.bf16.msra.mxu0 0
  %100 = vmatprep.subr.bf16.mxu0 0
  %101 = vmatpush1.bf16.msra.mxu0 0
  %102 = vmatprep.subr.bf16.mxu0 0
  %103 = vmatpush1.bf16.msra.mxu0 0
  %104 = vmatprep.subr.bf16.mxu0 0
  %105 = vmatpush1.bf16.msra.mxu0 0
  %106 = vmatprep.mubr.bf16.mxu0 0
  %107 = vmatmul.mubr.bf16.gmra.mrb[0].mxu0 %v72
  %v108 = vpop.f32.mrb[0].mxu0
  %v109 = vadd.f32 %v39, %v108
  %v110 = vpop.f32.mrb[0].mxu0
  %v111 = vpop.f32.mrb[0].mxu0
  %v112 = vadd.f32 %v39, %v111
  %v113 = vpop.f32.mrb[0].mxu0
  %114 = vdwg.mxu0
  %v115 = vld [vmem:[%s3] sm:$0xf]
  %v116 = vld [vmem:[%s3 + $0x4] sm:$0xf]
  %v117 = vunpack.c.l.bf16 %v115
  %v118 = vunpack.c.l.bf16 %v116
  %v119 = vld [vmem:[%s4] sm:$0x1]
  %v120 = vld [vmem:[%s5] sm:$0x1]
  %v121 = vadd.f32 %v109, %v117
  %v122 = vadd.f32 %v112, %v118
  %vm123 = vcmask 261120
  %v124 = vsel %vm123, %v121, 0.0
  %125 = vadd.xlane.f32.xlu0 %v124
  %v126 = vpop.xlane.xlu0 %125
  %v127 = vsel %vm123, %v122, 0.0
  %128 = vadd.xlane.f32.xlu0 %v127
  %v129 = vpop.xlane.xlu0 %128
  %v130 = vrcp.pop 32.0
  %v131 = vmul.f32 %v126, %v130
  %v132 = vmul.f32 %v129, %v130
  %v133 = vsub.f32 %v121, %v131
  %v134 = vsub.f32 %v122, %v132
  %v135 = vmul.f32 %v133, %v133
  %v136 = vmul.f32 %v134, %v134
  %v137 = vsel %vm123, %v135, 0.0
  %138 = vadd.xlane.f32.xlu0 %v137
  %v139 = vpop.xlane.xlu0 %138
  %v140 = vsel %vm123, %v136, 0.0
  %141 = vadd.xlane.f32.xlu0 %v140
  %v142 = vpop.xlane.xlu0 %141
  %v143 = vmul.f32 %v139, %v130
  %v144 = vmul.f32 %v142, %v130
  %v145 = vadd.f32 %v143, 1e-12
  %v146 = vadd.f32 %v144, 1e-12
  %v147 = vrsqrt.pop %v145
  %v148 = vrsqrt.pop %v146
  %v149 = vmul.f32 %v133, %v147
  %v150 = vmul.f32 %v134, %v148
  %v152 = vlaneseq
  %v153 = vshrl.u32 %v152, 7
  %v154 = vsub.s32 0, %v153
  %v155 = vrot.slane %v119, %v154
  %v157 = vmul.f32 %v149, %v155
  %v158 = vmul.f32 %v150, %v155
  %v160 = vlaneseq
  %v161 = vshrl.u32 %v160, 7
  %v162 = vsub.s32 0, %v161
  %v163 = vrot.slane %v120, %v162
  %v165 = vadd.f32 %v157, %v163
  %v166 = vadd.f32 %v158, %v163
  %v167 = vpack.c.bf16 %v166, %v165
  %v169 = vunpack.c.l.b16 %v167
  %v170 = vunpack.c.h.b16 %v167
  %v171 = vpack.c.b16 %v169, %v169
  %v172 = vpack.c.b16 %v170, %v170
  %vm175 = vcmask 257024
  %176 = vst.msk [vmem:[%s6] sm:$0xf] %vm175, %v171
  %177 = vst.msk [vmem:[%s6 + $0x4] sm:$0xf] %vm175, %v172
  // Predicated region
  $region26: #{sa_linear_model_forward.17} parent=0 // pred_check
    _
  $region27: #{sa_linear_model_forward.17} parent=0 // pred_check_branch
    %179 = sbr.rel (0) target = $region29
  $region28: #{sa_linear_model_forward.17} parent=0 // pred_region
    _
  $region29: #{sa_linear_model_forward.17} parent=0 // pred_fallthru
    _
  // Predicated region
  $region30: #{sa_linear_model_forward.17} parent=0 // pred_check
    _
  $region31: #{sa_linear_model_forward.17} parent=0 // pred_check_branch
    %181 = sbr.rel (0) target = $region33
  $region32: #{sa_linear_model_forward.17} parent=0 // pred_region
    _
  $region33: #{sa_linear_model_forward.17} parent=0 // pred_fallthru
    _

</llo_original>
